<compile_context>
chip_gen: v6e
topology: v6e:2x2x1
jax: 0.10.0
libtpu: 0.0.40
codegen_flags: <defaults>
</compile_context>

<pallas_src>
import jax
import jax.numpy as jnp
from jax import lax
from jax.experimental import pallas as pl
from jax.experimental.pallas import tpu as pltpu

H = 256   # hidden size (fixed by nn.Linear(256, 256))
S = 256   # sequence length; must equal H for matmul(y, y) to be valid
B = 2     # batch ("middle" dim of the original (S, B, H) input)


def _linear_xwT(x, w, b_row):
    """x @ W^T + b with W in PyTorch (out, in) layout, no materialized W^T."""
    a = lax.dot_general(
        x, w,
        dimension_numbers=(((1,), (1,)), ((), ())),   # contract both "in" dims
        preferred_element_type=jnp.float32)
    return a + b_row


def fused_kernel_merged(x_ref, w_ref, b_ref, o_ref):
    """Single grid step (v5e / v6e): per-batch Linear + self-matmul, unrolled.

    x_ref : (S, B*H)  input; batch j lives in the lane-aligned column block
                      [:, j*H:(j+1)*H]  (static view, no strided gather)
    w_ref : (H, H)    PyTorch Linear weight (out, in)
    b_ref : (1, H)    bias
    o_ref : (B, S, S) output
    """
    w = w_ref[...]
    bias = b_ref[...]
    for j in range(B):  # B == 2, fully unrolled at trace time
        x_j = x_ref[:, j * H:(j + 1) * H]          # (S, H) lane-aligned view
        a = _linear_xwT(x_j, w, bias)              # (S, H) f32 activation
        o_ref[j] = jnp.dot(
            a, a, preferred_element_type=jnp.float32).astype(o_ref.dtype)


def fused_kernel_batched(x_ref, w_ref, b_ref, o_ref):
    """grid=(B,) (v7x): one batch element per grid step / TensorCore.

    x_ref arrives as the per-batch (S, H) block (dense, pipelined DMA),
    so no in-kernel slicing is needed.
    """
    a = _linear_xwT(x_ref[...], w_ref[...], b_ref[...])   # (S, H) f32
    o_ref[0] = jnp.dot(
        a, a, preferred_element_type=jnp.float32).astype(o_ref.dtype)


def _cost_estimate():
    flops = 2 * (S * B) * H * H + B * 2 * S * S * H           # Linear + A@A
    bytes_accessed = 4 * (S * B * H + H * H + H + B * S * S)  # x, W, b, out
    return pl.CostEstimate(flops=flops, transcendentals=0,
                           bytes_accessed=bytes_accessed)


def _use_batch_parallel_grid():
    # v7x has 2 TensorCores per chip: shard the batch across them.
    try:
        kind = jax.devices()[0].device_kind.lower()
    except Exception:
        return False
    return ("v7" in kind) or ("7x" in kind)


def model_forward(x, w, b):
    """x: (S, B, H) f32; w: (H, H) PyTorch layout (out, in); b: (H,)."""
    x2d = x.reshape(S, B * H)   # contiguous flatten: free, no extra HBM pass
    b2 = b.reshape(1, H)
    cost = _cost_estimate()

    if _use_batch_parallel_grid():
        # v7x: batch-parallel across the two TensorCores; each core only
        # DMAs its own (S, H) column block of x.
        return pl.pallas_call(
            fused_kernel_batched,
            out_shape=jax.ShapeDtypeStruct((B, S, S), jnp.float32),
            grid_spec=pltpu.PrefetchScalarGridSpec(
                num_scalar_prefetch=0,
                grid=(B,),
                in_specs=[
                    pl.BlockSpec((S, H), lambda j: (0, j)),   # per-batch block
                    pl.BlockSpec((H, H), lambda j: (0, 0)),
                    pl.BlockSpec((1, H), lambda j: (0, 0)),
                ],
                out_specs=pl.BlockSpec((1, S, S), lambda j: (j, 0, 0)),
            ),
            compiler_params=pltpu.CompilerParams(
                dimension_semantics=("parallel",)),
            cost_estimate=cost,
        )(x2d, w, b2)

    # v5e / v6e (single TensorCore): one grid step, everything resident.
    return pl.pallas_call(
        fused_kernel_merged,
        out_shape=jax.ShapeDtypeStruct((B, S, S), jnp.float32),
        grid_spec=pltpu.PrefetchScalarGridSpec(
            num_scalar_prefetch=0,
            grid=(1,),
            in_specs=[
                pl.BlockSpec((S, B * H), lambda i: (0, 0)),
                pl.BlockSpec((H, H), lambda i: (0, 0)),
                pl.BlockSpec((1, H), lambda i: (0, 0)),
            ],
            out_specs=pl.BlockSpec((B, S, S), lambda i: (0, 0, 0)),
        ),
        compiler_params=pltpu.CompilerParams(
            dimension_semantics=("arbitrary",)),
        cost_estimate=cost,
    )(x2d, w, b2)


def reference_forward(x, w, b):
    hi = jax.lax.Precision.HIGHEST
    y = jnp.einsum("sbh,oh->sbo", x, w, precision=hi) + b   # Linear
    y = jnp.transpose(y, (1, 0, 2))                         # transpose(0, 1)
    return jnp.einsum("bsk,bkj->bsj", y, y, precision=hi)   # matmul(y, y)


if __name__ == "__main__":
    key = jax.random.PRNGKey(0)
    kx, kw, kb = jax.random.split(key, 3)

    # deterministic "parameters" (PyTorch-style uniform(-1/sqrt(H), 1/sqrt(H)))
    bound = 1.0 / (H ** 0.5)
    w = jax.random.uniform(kw, (H, H), jnp.float32, -bound, bound)
    b = jax.random.uniform(kb, (H,), jnp.float32, -bound, bound)
    x = jax.random.normal(kx, (S, B, H), jnp.float32)

    fwd = jax.jit(model_forward)
    out = jax.block_until_ready(fwd(x, w, b))

    ref = reference_forward(x, w, b)
    assert out.shape == (B, S, S), out.shape
    assert jnp.allclose(out, ref, atol=1e-2, rtol=1e-3), float(
        jnp.max(jnp.abs(out - ref)))

    print("KERNEL_OK")
</pallas_src>

<mosaic_0001>
module attributes {stable_mosaic.version = 11 : i64} {
  func.func @fused_kernel_merged(%arg0: i32, %arg1: memref<256x512xf32, #tpu.memory_space<vmem>>, %arg2: memref<256x256xf32, #tpu.memory_space<vmem>>, %arg3: memref<1x256xf32, #tpu.memory_space<vmem>>, %arg4: memref<2x256x256xf32, #tpu.memory_space<vmem>>) attributes {dimension_semantics = [#tpu.dimension_semantics<arbitrary>], iteration_bounds = array<i64: 1>, scalar_prefetch = 0 : i64, scratch_operands = 0 : i64, tpu.core_type = #tpu.core_type<tc>, window_params = [{pipeline_mode = #tpu.pipeline_mode<synchronous>, transform_indices = @transform_0, window_bounds = array<i64: 256, 512>}, {pipeline_mode = #tpu.pipeline_mode<synchronous>, transform_indices = @transform_1, window_bounds = array<i64: 256, 256>}, {pipeline_mode = #tpu.pipeline_mode<synchronous>, transform_indices = @transform_2, window_bounds = array<i64: 1, 256>}, {pipeline_mode = #tpu.pipeline_mode<synchronous>, transform_indices = @transform_3, window_bounds = array<i64: 2, 256, 256>}]} {
    %c0 = arith.constant 0 : index
    %c0_0 = arith.constant 0 : index
    %0 = vector.load %arg2[%c0, %c0_0] : memref<256x256xf32, #tpu.memory_space<vmem>>, vector<256x256xf32>
    %c0_1 = arith.constant 0 : index
    %c0_2 = arith.constant 0 : index
    %1 = vector.load %arg3[%c0_1, %c0_2] : memref<1x256xf32, #tpu.memory_space<vmem>>, vector<1x256xf32>
    %c0_3 = arith.constant 0 : index
    %c0_4 = arith.constant 0 : index
    %2 = vector.load %arg1[%c0_3, %c0_4] : memref<256x512xf32, #tpu.memory_space<vmem>>, vector<256x256xf32>
    %cst = arith.constant dense<0.000000e+00> : vector<256x256xf32>
    %3 = tpu.matmul %2, %0, %cst {dimension_numbers = #tpu.dot_dimension_numbers<[1], [1], [0], [0], [0, 0, 1, 0], [], []>} : vector<256x256xf32>, vector<256x256xf32>, vector<256x256xf32> -> vector<256x256xf32>
    %4 = vector.broadcast %1 : vector<1x256xf32> to vector<256x256xf32>
    %5 = arith.addf %3, %4 : vector<256x256xf32>
    %cst_5 = arith.constant dense<0.000000e+00> : vector<256x256xf32>
    %6 = tpu.matmul %5, %5, %cst_5 {dimension_numbers = #tpu.dot_dimension_numbers<[1], [0], [0], [1], [0, 0, 1, 1], [], []>} : vector<256x256xf32>, vector<256x256xf32>, vector<256x256xf32> -> vector<256x256xf32>
    %c0_6 = arith.constant 0 : index
    %c0_7 = arith.constant 0 : index
    %c0_8 = arith.constant 0 : index
    %7 = vector.load %arg4[%c0_6, %c0_7, %c0_8] : memref<2x256x256xf32, #tpu.memory_space<vmem>>, vector<1x256x256xf32>
    %8 = vector.shape_cast %7 : vector<1x256x256xf32> to vector<256x256xf32>
    %9 = vector.shape_cast %6 : vector<256x256xf32> to vector<1x256x256xf32>
    tpu.vector_store %arg4[%c0_6, %c0_7, %c0_8], %9 {strides = array<i32>} : memref<2x256x256xf32, #tpu.memory_space<vmem>>, vector<1x256x256xf32>,
    %c0_9 = arith.constant 0 : index
    %c256 = arith.constant 256 : index
    %10 = vector.load %arg1[%c0_9, %c256] : memref<256x512xf32, #tpu.memory_space<vmem>>, vector<256x256xf32>
    %cst_10 = arith.constant dense<0.000000e+00> : vector<256x256xf32>
    %11 = tpu.matmul %10, %0, %cst_10 {dimension_numbers = #tpu.dot_dimension_numbers<[1], [1], [0], [0], [0, 0, 1, 0], [], []>} : vector<256x256xf32>, vector<256x256xf32>, vector<256x256xf32> -> vector<256x256xf32>
    %12 = vector.broadcast %1 : vector<1x256xf32> to vector<256x256xf32>
    %13 = arith.addf %11, %12 : vector<256x256xf32>
    %cst_11 = arith.constant dense<0.000000e+00> : vector<256x256xf32>
    %14 = tpu.matmul %13, %13, %cst_11 {dimension_numbers = #tpu.dot_dimension_numbers<[1], [0], [0], [1], [0, 0, 1, 1], [], []>} : vector<256x256xf32>, vector<256x256xf32>, vector<256x256xf32> -> vector<256x256xf32>
    %c1 = arith.constant 1 : index
    %c0_12 = arith.constant 0 : index
    %c0_13 = arith.constant 0 : index
    %15 = vector.load %arg4[%c1, %c0_12, %c0_13] : memref<2x256x256xf32, #tpu.memory_space<vmem>>, vector<1x256x256xf32>
    %16 = vector.shape_cast %15 : vector<1x256x256xf32> to vector<256x256xf32>
    %17 = vector.shape_cast %14 : vector<256x256xf32> to vector<1x256x256xf32>
    tpu.vector_store %arg4[%c1, %c0_12, %c0_13], %17 {strides = array<i32>} : memref<2x256x256xf32, #tpu.memory_space<vmem>>, vector<1x256x256xf32>,
    return
  }
  func.func @transform_0(%arg0: i32) -> (i32, i32) {
    %c0_i32 = arith.constant 0 : i32
    %c0_i32_0 = arith.constant 0 : i32
    %c0_i32_1 = arith.constant 0 : i32
    return %c0_i32, %c0_i32_0 : i32, i32
  }
  func.func @transform_1(%arg0: i32) -> (i32, i32) {
    %c0_i32 = arith.constant 0 : i32
    %c0_i32_0 = arith.constant 0 : i32
    %c0_i32_1 = arith.constant 0 : i32
    return %c0_i32, %c0_i32_0 : i32, i32
  }
  func.func @transform_2(%arg0: i32) -> (i32, i32) {
    %c0_i32 = arith.constant 0 : i32
    %c0_i32_0 = arith.constant 0 : i32
    %c0_i32_1 = arith.constant 0 : i32
    return %c0_i32, %c0_i32_0 : i32, i32
  }
  func.func @transform_3(%arg0: i32) -> (i32, i32, i32) {
    %c0_i32 = arith.constant 0 : i32
    %c0_i32_0 = arith.constant 0 : i32
    %c0_i32_1 = arith.constant 0 : i32
    %c0_i32_2 = arith.constant 0 : i32
    return %c0_i32, %c0_i32_0, %c0_i32_1 : i32, i32, i32
  }
}

</mosaic_0001>

<llo_original>
// kernel: model_forward.1
$region0: #{model_forward.1}
  #allocation0 [shape = 'u32[]', space=smem, size = 0x4, offset = 0x4, fixed_abs, tag = 'smem constant byte address 0x4 - core index']
  #allocation1 [shape = 'u32[144,128]{1,0:T(1,128)}', space=vmem, size = 0x12000, scoped, tag = 'internal scratch']
  %s0 = inlined_call_operand.vmem [shape: f32[256,512], index: 0, kind: input, shape index: {}]
  %s1 = inlined_call_operand.vmem [shape: f32[256,256], index: 1, kind: input, shape index: {}]
  %s2 = inlined_call_operand.vmem [shape: f32[1,256], index: 2, kind: input, shape index: {}]
  %s3 = inlined_call_operand.hbm [shape: f32[2,256,256], index: 3, kind: output, shape index: {}]
  %s4 = sld [smem:[#allocation0]]
  $region22: #{model_forward.1} parent=0
    _
  %s6 = ssub.s32 1, %s4
  %s7 = scalar_select 0, %s6, %s4
  $region1: #{model_forward.1} parent=0
    #allocation2 [shape = 'u8[524288]{0}', space=vmem, size = 0x80000, scoped, tag = 'output window, operand 0, single buffered']
    #allocation3 [shape = 's32[1]{0}', space=sflag, size = 0x4, scoped, tag = 'scoped memory for model_forward.1']
    %8 = vsyncpa [#allocation3], 0
    // Predicated region
    $region2: #{model_forward.1} parent=1 // pred_check
      _
    $region3: #{model_forward.1} parent=1 // pred_check_branch
      %10 = sbr.rel (0) target = $region5
    $region4: #{model_forward.1} parent=1 // pred_region
      _
    $region5: #{model_forward.1} parent=1 // pred_fallthru
      _
    // Predicated region
    $region6: #{model_forward.1} parent=1 // pred_check
      _
    $region7: #{model_forward.1} parent=1 // pred_check_branch
      %12 = sbr.rel (0) target = $region9
    $region8: #{model_forward.1} parent=1 // pred_region
      _
    $region9: #{model_forward.1} parent=1 // pred_fallthru
      _
    // Predicated region
    $region10: #{model_forward.1} parent=1 // pred_check
      _
    $region11: #{model_forward.1} parent=1 // pred_check_branch
      %14 = sbr.rel (0) target = $region13
    $region12: #{model_forward.1} parent=1 // pred_region
      _
    $region13: #{model_forward.1} parent=1 // pred_fallthru
      _
    %v15 = vld [vmem:[%s1] sm:$0xff]
    %v16 = vld [vmem:[%s1 + $0x8] sm:$0xff]
    %v17 = vld [vmem:[%s1 + $0x10] sm:$0xff]
    %v18 = vld [vmem:[%s1 + $0x18] sm:$0xff]
    %v19 = vld [vmem:[%s1 + $0x20] sm:$0xff]
    %v20 = vld [vmem:[%s1 + $0x28] sm:$0xff]
    %v21 = vld [vmem:[%s1 + $0x30] sm:$0xff]
    %v22 = vld [vmem:[%s1 + $0x38] sm:$0xff]
    %v23 = vld [vmem:[%s1 + $0x40] sm:$0xff]
    %v24 = vld [vmem:[%s1 + $0x48] sm:$0xff]
    %v25 = vld [vmem:[%s1 + $0x50] sm:$0xff]
    %v26 = vld [vmem:[%s1 + $0x58] sm:$0xff]
    %v27 = vld [vmem:[%s1 + $0x60] sm:$0xff]
    %v28 = vld [vmem:[%s1 + $0x68] sm:$0xff]
    %v29 = vld [vmem:[%s1 + $0x70] sm:$0xff]
    %v30 = vld [vmem:[%s1 + $0x78] sm:$0xff]
    %v31 = vld [vmem:[%s1 + $0x80] sm:$0xff]
    %v32 = vld [vmem:[%s1 + $0x88] sm:$0xff]
    %v33 = vld [vmem:[%s1 + $0x90] sm:$0xff]
    %v34 = vld [vmem:[%s1 + $0x98] sm:$0xff]
    %v35 = vld [vmem:[%s1 + $0xa0] sm:$0xff]
    %v36 = vld [vmem:[%s1 + $0xa8] sm:$0xff]
    %v37 = vld [vmem:[%s1 + $0xb0] sm:$0xff]
    %v38 = vld [vmem:[%s1 + $0xb8] sm:$0xff]
    %v39 = vld [vmem:[%s1 + $0xc0] sm:$0xff]
    %v40 = vld [vmem:[%s1 + $0xc8] sm:$0xff]
    %v41 = vld [vmem:[%s1 + $0xd0] sm:$0xff]
    %v42 = vld [vmem:[%s1 + $0xd8] sm:$0xff]
    %v43 = vld [vmem:[%s1 + $0xe0] sm:$0xff]
    %v44 = vld [vmem:[%s1 + $0xe8] sm:$0xff]
    %v45 = vld [vmem:[%s1 + $0xf0] sm:$0xff]
    %v46 = vld [vmem:[%s1 + $0xf8] sm:$0xff]
    %v47 = vld [vmem:[%s1 + $0x100] sm:$0xff]
    %v48 = vld [vmem:[%s1 + $0x108] sm:$0xff]
    %v49 = vld [vmem:[%s1 + $0x110] sm:$0xff]
    %v50 = vld [vmem:[%s1 + $0x118] sm:$0xff]
    %v51 = vld [vmem:[%s1 + $0x120] sm:$0xff]
    %v52 = vld [vmem:[%s1 + $0x128] sm:$0xff]
    %v53 = vld [vmem:[%s1 + $0x130] sm:$0xff]
    %v54 = vld [vmem:[%s1 + $0x138] sm:$0xff]
    %v55 = vld [vmem:[%s1 + $0x140] sm:$0xff]
    %v56 = vld [vmem:[%s1 + $0x148] sm:$0xff]
    %v57 = vld [vmem:[%s1 + $0x150] sm:$0xff]
    %v58 = vld [vmem:[%s1 + $0x158] sm:$0xff]
    %v59 = vld [vmem:[%s1 + $0x160] sm:$0xff]
    %v60 = vld [vmem:[%s1 + $0x168] sm:$0xff]
    %v61 = vld [vmem:[%s1 + $0x170] sm:$0xff]
    %v62 = vld [vmem:[%s1 + $0x178] sm:$0xff]
    %v63 = vld [vmem:[%s1 + $0x180] sm:$0xff]
    %v64 = vld [vmem:[%s1 + $0x188] sm:$0xff]
    %v65 = vld [vmem:[%s1 + $0x190] sm:$0xff]
    %v66 = vld [vmem:[%s1 + $0x198] sm:$0xff]
    %v67 = vld [vmem:[%s1 + $0x1a0] sm:$0xff]
    %v68 = vld [vmem:[%s1 + $0x1a8] sm:$0xff]
    %v69 = vld [vmem:[%s1 + $0x1b0] sm:$0xff]
    %v70 = vld [vmem:[%s1 + $0x1b8] sm:$0xff]
    %v71 = vld [vmem:[%s1 + $0x1c0] sm:$0xff]
    %v72 = vld [vmem:[%s1 + $0x1c8] sm:$0xff]
    %v73 = vld [vmem:[%s1 + $0x1d0] sm:$0xff]
    %v74 = vld [vmem:[%s1 + $0x1d8] sm:$0xff]
    %v75 = vld [vmem:[%s1 + $0x1e0] sm:$0xff]
    %v76 = vld [vmem:[%s1 + $0x1e8] sm:$0xff]
    %v77 = vld [vmem:[%s1 + $0x1f0] sm:$0xff]
    %v78 = vld [vmem:[%s1 + $0x1f8] sm:$0xff]
    %v79 = vld [vmem:[%s2] sm:$0x3]
    %v80 = vld [vmem:[%s0] sm:$0xff]
    %v81 = vld [vmem:[%s0 + $0x8] sm:$0xff]
    %v82 = vld [vmem:[%s0 + $0x20] sm:$0xff]
    %v83 = vld [vmem:[%s0 + $0x28] sm:$0xff]
    %v84 = vld [vmem:[%s0 + $0x40] sm:$0xff]
    %v85 = vld [vmem:[%s0 + $0x48] sm:$0xff]
    %v86 = vld [vmem:[%s0 + $0x60] sm:$0xff]
    %v87 = vld [vmem:[%s0 + $0x68] sm:$0xff]
    %v88 = vld [vmem:[%s0 + $0x80] sm:$0xff]
    %v89 = vld [vmem:[%s0 + $0x88] sm:$0xff]
    %v90 = vld [vmem:[%s0 + $0xa0] sm:$0xff]
    %v91 = vld [vmem:[%s0 + $0xa8] sm:$0xff]
    %v92 = vld [vmem:[%s0 + $0xc0] sm:$0xff]
    %v93 = vld [vmem:[%s0 + $0xc8] sm:$0xff]
    %v94 = vld [vmem:[%s0 + $0xe0] sm:$0xff]
    %v95 = vld [vmem:[%s0 + $0xe8] sm:$0xff]
    %v96 = vld [vmem:[%s0 + $0x100] sm:$0xff]
    %v97 = vld [vmem:[%s0 + $0x108] sm:$0xff]
    %v98 = vld [vmem:[%s0 + $0x120] sm:$0xff]
    %v99 = vld [vmem:[%s0 + $0x128] sm:$0xff]
    %v100 = vld [vmem:[%s0 + $0x140] sm:$0xff]
    %v101 = vld [vmem:[%s0 + $0x148] sm:$0xff]
    %v102 = vld [vmem:[%s0 + $0x160] sm:$0xff]
    %v103 = vld [vmem:[%s0 + $0x168] sm:$0xff]
    %v104 = vld [vmem:[%s0 + $0x180] sm:$0xff]
    %v105 = vld [vmem:[%s0 + $0x188] sm:$0xff]
    %v106 = vld [vmem:[%s0 + $0x1a0] sm:$0xff]
    %v107 = vld [vmem:[%s0 + $0x1a8] sm:$0xff]
    %v108 = vld [vmem:[%s0 + $0x1c0] sm:$0xff]
    %v109 = vld [vmem:[%s0 + $0x1c8] sm:$0xff]
    %v110 = vld [vmem:[%s0 + $0x1e0] sm:$0xff]
    %v111 = vld [vmem:[%s0 + $0x1e8] sm:$0xff]
    %v112 = vld [vmem:[%s0 + $0x200] sm:$0xff]
    %v113 = vld [vmem:[%s0 + $0x208] sm:$0xff]
    %v114 = vld [vmem:[%s0 + $0x220] sm:$0xff]
    %v115 = vld [vmem:[%s0 + $0x228] sm:$0xff]
    %v116 = vld [vmem:[%s0 + $0x240] sm:$0xff]
    %v117 = vld [vmem:[%s0 + $0x248] sm:$0xff]
    %v118 = vld [vmem:[%s0 + $0x260] sm:$0xff]
    %v119 = vld [vmem:[%s0 + $0x268] sm:$0xff]
    %v120 = vld [vmem:[%s0 + $0x280] sm:$0xff]
    %v121 = vld [vmem:[%s0 + $0x288] sm:$0xff]
    %v122 = vld [vmem:[%s0 + $0x2a0] sm:$0xff]
    %v123 = vld [vmem:[%s0 + $0x2a8] sm:$0xff]
    %v124 = vld [vmem:[%s0 + $0x2c0] sm:$0xff]
    %v125 = vld [vmem:[%s0 + $0x2c8] sm:$0xff]
    %v126 = vld [vmem:[%s0 + $0x2e0] sm:$0xff]
    %v127 = vld [vmem:[%s0 + $0x2e8] sm:$0xff]
    %v128 = vld [vmem:[%s0 + $0x300] sm:$0xff]
    %v129 = vld [vmem:[%s0 + $0x308] sm:$0xff]
    %v130 = vld [vmem:[%s0 + $0x320] sm:$0xff]
    %v131 = vld [vmem:[%s0 + $0x328] sm:$0xff]
    %v132 = vld [vmem:[%s0 + $0x340] sm:$0xff]
    %v133 = vld [vmem:[%s0 + $0x348] sm:$0xff]
    %v134 = vld [vmem:[%s0 + $0x360] sm:$0xff]
    %v135 = vld [vmem:[%s0 + $0x368] sm:$0xff]
    %v136 = vld [vmem:[%s0 + $0x380] sm:$0xff]
    %v137 = vld [vmem:[%s0 + $0x388] sm:$0xff]
    %v138 = vld [vmem:[%s0 + $0x3a0] sm:$0xff]
    %v139 = vld [vmem:[%s0 + $0x3a8] sm:$0xff]
    %v140 = vld [vmem:[%s0 + $0x3c0] sm:$0xff]
    %v141 = vld [vmem:[%s0 + $0x3c8] sm:$0xff]
    %v142 = vld [vmem:[%s0 + $0x3e0] sm:$0xff]
    %v143 = vld [vmem:[%s0 + $0x3e8] sm:$0xff]
    %v145 = vlaneseq
    %v146 = vshrl.u32 %v145, 7
    %v147 = vsub.s32 0, %v146
    %v148 = vrot.slane %v79, %v147
    %v149 = vlaneseq
    %v150 = vshrl.u32 %v149, 7
    %v151 = vsub.s32 1, %v150
    %v152 = vrot.slane %v79, %v151
    %155 = vmatprep.subr.mxu0 %v46
    %156 = vmatpush1.xpose.msra.mxu0 %v45
    %157 = vmatprep.subr.mxu0 %v44
    %158 = vmatpush1.xpose.msra.mxu0 %v43
    %159 = vmatprep.subr.mxu0 %v42
    %160 = vmatpush1.xpose.msra.mxu0 %v41
    %161 = vmatprep.subr.mxu0 %v40
    %162 = vmatpush1.xpose.msra.mxu0 %v39
    %163 = vmatprep.subr.mxu0 %v38
    %164 = vmatpush1.xpose.msra.mxu0 %v37
    %165 = vmatprep.subr.mxu0 %v36
    %166 = vmatpush1.xpose.msra.mxu0 %v35
    %167 = vmatprep.subr.mxu0 %v34
    %168 = vmatpush1.xpose.msra.mxu0 %v33
    %169 = vmatprep.subr.mxu0 %v32
    %170 = vmatpush1.xpose.msra.mxu0 %v31
    %171 = vmatprep.subr.mxu0 %v30
    %172 = vmatpush1.xpose.msra.mxu0 %v29
    %173 = vmatprep.subr.mxu0 %v28
    %174 = vmatpush1.xpose.msra.mxu0 %v27
    %175 = vmatprep.subr.mxu0 %v26
    %176 = vmatpush1.xpose.msra.mxu0 %v25
    %177 = vmatprep.subr.mxu0 %v24
    %178 = vmatpush1.xpose.msra.mxu0 %v23
    %179 = vmatprep.subr.mxu0 %v22
    %180 = vmatpush1.xpose.msra.mxu0 %v21
    %181 = vmatprep.subr.mxu0 %v20
    %182 = vmatpush1.xpose.msra.mxu0 %v19
    %183 = vmatprep.subr.mxu0 %v18
    %184 = vmatpush1.xpose.msra.mxu0 %v17
    %185 = vmatprep.subr.mxu0 %v16
    %186 = vmatpush1.xpose.msra.mxu0 %v15
    %187 = vmatprep.subr.mxu0 %v78
    %188 = vmatpush2.xpose.msra.mxu0 %v77
    %189 = vmatprep.subr.mxu0 %v76
    %190 = vmatpush2.xpose.msra.mxu0 %v75
    %191 = vmatprep.subr.mxu0 %v74
    %192 = vmatpush2.xpose.msra.mxu0 %v73
    %193 = vmatprep.subr.mxu0 %v72
    %194 = vmatpush2.xpose.msra.mxu0 %v71
    %195 = vmatprep.subr.mxu0 %v70
    %196 = vmatpush2.xpose.msra.mxu0 %v69
    %197 = vmatprep.subr.mxu0 %v68
    %198 = vmatpush2.xpose.msra.mxu0 %v67
    %199 = vmatprep.subr.mxu0 %v66
    %200 = vmatpush2.xpose.msra.mxu0 %v65
    %201 = vmatprep.subr.mxu0 %v64
    %202 = vmatpush2.xpose.msra.mxu0 %v63
    %203 = vmatprep.subr.mxu0 %v62
    %204 = vmatpush2.xpose.msra.mxu0 %v61
    %205 = vmatprep.subr.mxu0 %v60
    %206 = vmatpush2.xpose.msra.mxu0 %v59
    %207 = vmatprep.subr.mxu0 %v58
    %208 = vmatpush2.xpose.msra.mxu0 %v57
    %209 = vmatprep.subr.mxu0 %v56
    %210 = vmatpush2.xpose.msra.mxu0 %v55
    %211 = vmatprep.subr.mxu0 %v54
    %212 = vmatpush2.xpose.msra.mxu0 %v53
    %213 = vmatprep.subr.mxu0 %v52
    %214 = vmatpush2.xpose.msra.mxu0 %v51
    %215 = vmatprep.subr.mxu0 %v50
    %216 = vmatpush2.xpose.msra.mxu0 %v49
    %217 = vmatprep.subr.mxu0 %v48
    %218 = vmatpush2.xpose.msra.mxu0 %v47
    %219 = vmatprep.mubr.f32.mxu0 %v81
    %220 = vmatmul.mubr.f32.gmra.mxu0 %v80
    %v221 = vpop.f32.mrf.mxu0
    %v222 = vadd.f32 %v148, %v221
    %v223 = vpop.f32.mrf.mxu0
    %v224 = vadd.f32 %v152, %v223
    %225 = vmatprep.mubr.f32.mxu0 %v83
    %226 = vmatmul.mubr.f32.gmra.mxu0 %v82
    %v227 = vpop.f32.mrf.mxu0
    %v228 = vadd.f32 %v148, %v227
    %v229 = vpop.f32.mrf.mxu0
    %v230 = vadd.f32 %v152, %v229
    %231 = vmatprep.mubr.f32.mxu0 %v85
    %232 = vmatmul.mubr.f32.gmra.mxu0 %v84
    %v233 = vpop.f32.mrf.mxu0
    %v234 = vadd.f32 %v148, %v233
    %v235 = vpop.f32.mrf.mxu0
    %v236 = vadd.f32 %v152, %v235
    %237 = vmatprep.mubr.f32.mxu0 %v87
    %238 = vmatmul.mubr.f32.gmra.mxu0 %v86
    %v239 = vpop.f32.mrf.mxu0
    %v240 = vadd.f32 %v148, %v239
    %v241 = vpop.f32.mrf.mxu0
    %v242 = vadd.f32 %v152, %v241
    %243 = vmatprep.mubr.f32.mxu0 %v89
    %244 = vmatmul.mubr.f32.gmra.mxu0 %v88
    %v245 = vpop.f32.mrf.mxu0
    %v246 = vadd.f32 %v148, %v245
    %v247 = vpop.f32.mrf.mxu0
    %v248 = vadd.f32 %v152, %v247
    %249 = vmatprep.mubr.f32.mxu0 %v91
    %250 = vmatmul.mubr.f32.gmra.mxu0 %v90
    %v251 = vpop.f32.mrf.mxu0
    %v252 = vadd.f32 %v148, %v251
    %v253 = vpop.f32.mrf.mxu0
    %v254 = vadd.f32 %v152, %v253
    %255 = vmatprep.mubr.f32.mxu0 %v93
    %256 = vmatmul.mubr.f32.gmra.mxu0 %v92
    %v257 = vpop.f32.mrf.mxu0
    %v258 = vadd.f32 %v148, %v257
    %v259 = vpop.f32.mrf.mxu0
    %v260 = vadd.f32 %v152, %v259
    %261 = vmatprep.mubr.f32.mxu0 %v95
    %262 = vmatmul.mubr.f32.gmra.mxu0 %v94
    %v263 = vpop.f32.mrf.mxu0
    %v264 = vadd.f32 %v148, %v263
    %v265 = vpop.f32.mrf.mxu0
    %v266 = vadd.f32 %v152, %v265
    %267 = vmatprep.mubr.f32.mxu0 %v97
    %268 = vmatmul.mubr.f32.gmra.mxu0 %v96
    %v269 = vpop.f32.mrf.mxu0
    %v270 = vadd.f32 %v148, %v269
    %v271 = vpop.f32.mrf.mxu0
    %v272 = vadd.f32 %v152, %v271
    %273 = vmatprep.mubr.f32.mxu0 %v99
    %274 = vmatmul.mubr.f32.gmra.mxu0 %v98
    %v275 = vpop.f32.mrf.mxu0
    %v276 = vadd.f32 %v148, %v275
    %v277 = vpop.f32.mrf.mxu0
    %v278 = vadd.f32 %v152, %v277
    %279 = vmatprep.mubr.f32.mxu0 %v101
    %280 = vmatmul.mubr.f32.gmra.mxu0 %v100
    %v281 = vpop.f32.mrf.mxu0
    %v282 = vadd.f32 %v148, %v281
    %v283 = vpop.f32.mrf.mxu0
    %v284 = vadd.f32 %v152, %v283
    %285 = vmatprep.mubr.f32.mxu0 %v103
    %286 = vmatmul.mubr.f32.gmra.mxu0 %v102
    %v287 = vpop.f32.mrf.mxu0
    %v288 = vadd.f32 %v148, %v287
    %v289 = vpop.f32.mrf.mxu0
    %v290 = vadd.f32 %v152, %v289
    %291 = vmatprep.mubr.f32.mxu0 %v105
    %292 = vmatmul.mubr.f32.gmra.mxu0 %v104
    %v293 = vpop.f32.mrf.mxu0
    %v294 = vadd.f32 %v148, %v293
    %v295 = vpop.f32.mrf.mxu0
    %v296 = vadd.f32 %v152, %v295
    %297 = vmatprep.mubr.f32.mxu0 %v107
    %298 = vmatmul.mubr.f32.gmra.mxu0 %v106
    %v299 = vpop.f32.mrf.mxu0
    %v300 = vadd.f32 %v148, %v299
    %v301 = vpop.f32.mrf.mxu0
    %v302 = vadd.f32 %v152, %v301
    %303 = vmatprep.mubr.f32.mxu0 %v109
    %304 = vmatmul.mubr.f32.gmra.mxu0 %v108
    %v305 = vpop.f32.mrf.mxu0
    %v306 = vadd.f32 %v148, %v305
    %v307 = vpop.f32.mrf.mxu0
    %v308 = vadd.f32 %v152, %v307
    %309 = vmatprep.mubr.f32.mxu0 %v111
    %310 = vmatmul.mubr.f32.gmra.mxu0 %v110
    %v311 = vpop.f32.mrf.mxu0
    %v312 = vadd.f32 %v148, %v311
    %v313 = vpop.f32.mrf.mxu0
    %v314 = vadd.f32 %v152, %v313
    %315 = vmatprep.mubr.f32.mxu0 %v113
    %316 = vmatmul.mubr.f32.gmra.mxu0 %v112
    %v317 = vpop.f32.mrf.mxu0
    %v318 = vadd.f32 %v148, %v317
    %v319 = vpop.f32.mrf.mxu0
    %v320 = vadd.f32 %v152, %v319
    %321 = vmatprep.mubr.f32.mxu0 %v115
    %322 = vmatmul.mubr.f32.gmra.mxu0 %v114
    %v323 = vpop.f32.mrf.mxu0
    %v324 = vadd.f32 %v148, %v323
    %v325 = vpop.f32.mrf.mxu0
    %v326 = vadd.f32 %v152, %v325
    %327 = vmatprep.mubr.f32.mxu0 %v117
    %328 = vmatmul.mubr.f32.gmra.mxu0 %v116
    %v329 = vpop.f32.mrf.mxu0
    %v330 = vadd.f32 %v148, %v329
    %v331 = vpop.f32.mrf.mxu0
    %v332 = vadd.f32 %v152, %v331
    %333 = vmatprep.mubr.f32.mxu0 %v119
    %334 = vmatmul.mubr.f32.gmra.mxu0 %v118
    %v335 = vpop.f32.mrf.mxu0
    %v336 = vadd.f32 %v148, %v335
    %v337 = vpop.f32.mrf.mxu0
    %v338 = vadd.f32 %v152, %v337
    %339 = vmatprep.mubr.f32.mxu0 %v121
    %340 = vmatmul.mubr.f32.gmra.mxu0 %v120
    %v341 = vpop.f32.mrf.mxu0
    %v342 = vadd.f32 %v148, %v341
    %v343 = vpop.f32.mrf.mxu0
    %v344 = vadd.f32 %v152, %v343
    %345 = vmatprep.mubr.f32.mxu0 %v123
    %346 = vmatmul.mubr.f32.gmra.mxu0 %v122
    %v347 = vpop.f32.mrf.mxu0
    %v348 = vadd.f32 %v148, %v347
    %v349 = vpop.f32.mrf.mxu0
    %v350 = vadd.f32 %v152, %v349
    %351 = vmatprep.mubr.f32.mxu0 %v125
    %352 = vmatmul.mubr.f32.gmra.mxu0 %v124
    %v353 = vpop.f32.mrf.mxu0
    %v354 = vadd.f32 %v148, %v353
    %v355 = vpop.f32.mrf.mxu0
    %v356 = vadd.f32 %v152, %v355
    %357 = vmatprep.mubr.f32.mxu0 %v127
    %358 = vmatmul.mubr.f32.gmra.mxu0 %v126
    %v359 = vpop.f32.mrf.mxu0
    %v360 = vadd.f32 %v148, %v359
    %v361 = vpop.f32.mrf.mxu0
    %v362 = vadd.f32 %v152, %v361
    %363 = vmatprep.mubr.f32.mxu0 %v129
    %364 = vmatmul.mubr.f32.gmra.mxu0 %v128
    %v365 = vpop.f32.mrf.mxu0
    %v366 = vadd.f32 %v148, %v365
    %v367 = vpop.f32.mrf.mxu0
    %v368 = vadd.f32 %v152, %v367
    %369 = vmatprep.mubr.f32.mxu0 %v131
    %370 = vmatmul.mubr.f32.gmra.mxu0 %v130
    %v371 = vpop.f32.mrf.mxu0
    %v372 = vadd.f32 %v148, %v371
    %v373 = vpop.f32.mrf.mxu0
    %v374 = vadd.f32 %v152, %v373
    %375 = vmatprep.mubr.f32.mxu0 %v133
    %376 = vmatmul.mubr.f32.gmra.mxu0 %v132
    %v377 = vpop.f32.mrf.mxu0
    %v378 = vadd.f32 %v148, %v377
    %v379 = vpop.f32.mrf.mxu0
    %v380 = vadd.f32 %v152, %v379
    %381 = vmatprep.mubr.f32.mxu0 %v135
    %382 = vmatmul.mubr.f32.gmra.mxu0 %v134
    %v383 = vpop.f32.mrf.mxu0
    %v384 = vadd.f32 %v148, %v383
    %v385 = vpop.f32.mrf.mxu0
    %v386 = vadd.f32 %v152, %v385
    %387 = vmatprep.mubr.f32.mxu0 %v137
    %388 = vmatmul.mubr.f32.gmra.mxu0 %v136
    %v389 = vpop.f32.mrf.mxu0
    %v390 = vadd.f32 %v148, %v389
    %v391 = vpop.f32.mrf.mxu0
    %v392 = vadd.f32 %v152, %v391
    %393 = vmatprep.mubr.f32.mxu0 %v139
    %394 = vmatmul.mubr.f32.gmra.mxu0 %v138
    %v395 = vpop.f32.mrf.mxu0
    %v396 = vadd.f32 %v148, %v395
    %v397 = vpop.f32.mrf.mxu0
    %v398 = vadd.f32 %v152, %v397
    %399 = vmatprep.mubr.f32.mxu0 %v141
    %400 = vmatmul.mubr.f32.gmra.mxu0 %v140
    %v401 = vpop.f32.mrf.mxu0
    %v402 = vadd.f32 %v148, %v401
    %v403 = vpop.f32.mrf.mxu0
    %v404 = vadd.f32 %v152, %v403
    %405 = vmatprep.mubr.f32.mxu0 %v143
    %406 = vmatmul.mubr.f32.gmra.mxu0 %v142
    %v407 = vpop.f32.mrf.mxu0
    %v408 = vadd.f32 %v148, %v407
    %v409 = vpop.f32.mrf.mxu0
    %v410 = vadd.f32 %v152, %v409
    %411 = vdwg.mxu0
    %412 = vmatprep.subr.mxu0 %v314
    %413 = vmatpush1.msra.mxu0 %v312
    %414 = vmatprep.subr.mxu0 %v308
    %415 = vmatpush1.msra.mxu0 %v306
    %416 = vmatprep.subr.mxu0 %v302
    %417 = vmatpush1.msra.mxu0 %v300
    %418 = vmatprep.subr.mxu0 %v296
    %419 = vmatpush1.msra.mxu0 %v294
    %420 = vmatprep.subr.mxu0 %v290
    %421 = vmatpush1.msra.mxu0 %v288
    %422 = vmatprep.subr.mxu0 %v284
    %423 = vmatpush1.msra.mxu0 %v282
    %424 = vmatprep.subr.mxu0 %v278
    %425 = vmatpush1.msra.mxu0 %v276
    %426 = vmatprep.subr.mxu0 %v272
    %427 = vmatpush1.msra.mxu0 %v270
    %428 = vmatprep.subr.mxu0 %v266
    %429 = vmatpush1.msra.mxu0 %v264
    %430 = vmatprep.subr.mxu0 %v260
    %431 = vmatpush1.msra.mxu0 %v258
    %432 = vmatprep.subr.mxu0 %v254
    %433 = vmatpush1.msra.mxu0 %v252
    %434 = vmatprep.subr.mxu0 %v248
    %435 = vmatpush1.msra.mxu0 %v246
    %436 = vmatprep.subr.mxu0 %v242
    %437 = vmatpush1.msra.mxu0 %v240
    %438 = vmatprep.subr.mxu0 %v236
    %439 = vmatpush1.msra.mxu0 %v234
    %440 = vmatprep.subr.mxu0 %v230
    %441 = vmatpush1.msra.mxu0 %v228
    %442 = vmatprep.subr.mxu0 %v224
    %443 = vmatpush1.msra.mxu0 %v222
    %444 = vmatprep.subr.mxu0 %v410
    %445 = vmatpush2.msra.mxu0 %v408
    %446 = vmatprep.subr.mxu0 %v404
    %447 = vmatpush2.msra.mxu0 %v402
    %448 = vmatprep.subr.mxu0 %v398
    %449 = vmatpush2.msra.mxu0 %v396
    %450 = vmatprep.subr.mxu0 %v392
    %451 = vmatpush2.msra.mxu0 %v390
    %452 = vmatprep.subr.mxu0 %v386
    %453 = vmatpush2.msra.mxu0 %v384
    %454 = vmatprep.subr.mxu0 %v380
    %455 = vmatpush2.msra.mxu0 %v378
    %456 = vmatprep.subr.mxu0 %v374
    %457 = vmatpush2.msra.mxu0 %v372
    %458 = vmatprep.subr.mxu0 %v368
    %459 = vmatpush2.msra.mxu0 %v366
    %460 = vmatprep.subr.mxu0 %v362
    %461 = vmatpush2.msra.mxu0 %v360
    %462 = vmatprep.subr.mxu0 %v356
    %463 = vmatpush2.msra.mxu0 %v354
    %464 = vmatprep.subr.mxu0 %v350
    %465 = vmatpush2.msra.mxu0 %v348
    %466 = vmatprep.subr.mxu0 %v344
    %467 = vmatpush2.msra.mxu0 %v342
    %468 = vmatprep.subr.mxu0 %v338
    %469 = vmatpush2.msra.mxu0 %v336
    %470 = vmatprep.subr.mxu0 %v332
    %471 = vmatpush2.msra.mxu0 %v330
    %472 = vmatprep.subr.mxu0 %v326
    %473 = vmatpush2.msra.mxu0 %v324
    %474 = vmatprep.subr.mxu0 %v320
    %475 = vmatpush2.msra.mxu0 %v318
    %476 = vmatprep.mubr.f32.mxu0 %v224
    %477 = vmatmul.mubr.f32.gmra.mxu0 %v222
    %v478 = vpop.f32.mrf.mxu0
    %v479 = vadd.f32 0.0, %v478
    %v480 = vpop.f32.mrf.mxu0
    %v481 = vadd.f32 0.0, %v480
    %482 = vmatprep.mubr.f32.mxu0 %v230
    %483 = vmatmul.mubr.f32.gmra.mxu0 %v228
    %v484 = vpop.f32.mrf.mxu0
    %v485 = vadd.f32 0.0, %v484
    %v486 = vpop.f32.mrf.mxu0
    %v487 = vadd.f32 0.0, %v486
    %488 = vmatprep.mubr.f32.mxu0 %v236
    %489 = vmatmul.mubr.f32.gmra.mxu0 %v234
    %v490 = vpop.f32.mrf.mxu0
    %v491 = vadd.f32 0.0, %v490
    %v492 = vpop.f32.mrf.mxu0
    %v493 = vadd.f32 0.0, %v492
    %494 = vmatprep.mubr.f32.mxu0 %v242
    %495 = vmatmul.mubr.f32.gmra.mxu0 %v240
    %v496 = vpop.f32.mrf.mxu0
    %v497 = vadd.f32 0.0, %v496
    %v498 = vpop.f32.mrf.mxu0
    %v499 = vadd.f32 0.0, %v498
    %500 = vmatprep.mubr.f32.mxu0 %v248
    %501 = vmatmul.mubr.f32.gmra.mxu0 %v246
    %v502 = vpop.f32.mrf.mxu0
    %v503 = vadd.f32 0.0, %v502
    %v504 = vpop.f32.mrf.mxu0
    %v505 = vadd.f32 0.0, %v504
    %506 = vmatprep.mubr.f32.mxu0 %v254
    %507 = vmatmul.mubr.f32.gmra.mxu0 %v252
    %v508 = vpop.f32.mrf.mxu0
    %v509 = vadd.f32 0.0, %v508
    %v510 = vpop.f32.mrf.mxu0
    %v511 = vadd.f32 0.0, %v510
    %512 = vmatprep.mubr.f32.mxu0 %v260
    %513 = vmatmul.mubr.f32.gmra.mxu0 %v258
    %v514 = vpop.f32.mrf.mxu0
    %v515 = vadd.f32 0.0, %v514
    %v516 = vpop.f32.mrf.mxu0
    %v517 = vadd.f32 0.0, %v516
    %518 = vmatprep.mubr.f32.mxu0 %v266
    %519 = vmatmul.mubr.f32.gmra.mxu0 %v264
    %v520 = vpop.f32.mrf.mxu0
    %v521 = vadd.f32 0.0, %v520
    %v522 = vpop.f32.mrf.mxu0
    %v523 = vadd.f32 0.0, %v522
    %524 = vmatprep.mubr.f32.mxu0 %v272
    %525 = vmatmul.mubr.f32.gmra.mxu0 %v270
    %v526 = vpop.f32.mrf.mxu0
    %v527 = vadd.f32 0.0, %v526
    %v528 = vpop.f32.mrf.mxu0
    %v529 = vadd.f32 0.0, %v528
    %530 = vmatprep.mubr.f32.mxu0 %v278
    %531 = vmatmul.mubr.f32.gmra.mxu0 %v276
    %v532 = vpop.f32.mrf.mxu0
    %v533 = vadd.f32 0.0, %v532
    %v534 = vpop.f32.mrf.mxu0
    %v535 = vadd.f32 0.0, %v534
    %536 = vmatprep.mubr.f32.mxu0 %v284
    %537 = vmatmul.mubr.f32.gmra.mxu0 %v282
    %v538 = vpop.f32.mrf.mxu0
    %v539 = vadd.f32 0.0, %v538
    %v540 = vpop.f32.mrf.mxu0
    %v541 = vadd.f32 0.0, %v540
    %542 = vmatprep.mubr.f32.mxu0 %v290
    %543 = vmatmul.mubr.f32.gmra.mxu0 %v288
    %v544 = vpop.f32.mrf.mxu0
    %v545 = vadd.f32 0.0, %v544
    %v546 = vpop.f32.mrf.mxu0
    %v547 = vadd.f32 0.0, %v546
    %548 = vmatprep.mubr.f32.mxu0 %v296
    %549 = vmatmul.mubr.f32.gmra.mxu0 %v294
    %v550 = vpop.f32.mrf.mxu0
    %v551 = vadd.f32 0.0, %v550
    %v552 = vpop.f32.mrf.mxu0
    %v553 = vadd.f32 0.0, %v552
    %554 = vmatprep.mubr.f32.mxu0 %v302
    %555 = vmatmul.mubr.f32.gmra.mxu0 %v300
    %v556 = vpop.f32.mrf.mxu0
    %v557 = vadd.f32 0.0, %v556
    %v558 = vpop.f32.mrf.mxu0
    %v559 = vadd.f32 0.0, %v558
    %560 = vmatprep.mubr.f32.mxu0 %v308
    %561 = vmatmul.mubr.f32.gmra.mxu0 %v306
    %v562 = vpop.f32.mrf.mxu0
    %v563 = vadd.f32 0.0, %v562
    %v564 = vpop.f32.mrf.mxu0
    %v565 = vadd.f32 0.0, %v564
    %566 = vmatprep.mubr.f32.mxu0 %v314
    %567 = vmatmul.mubr.f32.gmra.mxu0 %v312
    %v568 = vpop.f32.mrf.mxu0
    %v569 = vadd.f32 0.0, %v568
    %v570 = vpop.f32.mrf.mxu0
    %v571 = vadd.f32 0.0, %v570
    %572 = vmatprep.mubr.f32.mxu0 %v320
    %573 = vmatmul.mubr.f32.gmra.mxu0 %v318
    %v574 = vpop.f32.mrf.mxu0
    %v575 = vadd.f32 0.0, %v574
    %v576 = vpop.f32.mrf.mxu0
    %v577 = vadd.f32 0.0, %v576
    %578 = vmatprep.mubr.f32.mxu0 %v326
    %579 = vmatmul.mubr.f32.gmra.mxu0 %v324
    %v580 = vpop.f32.mrf.mxu0
    %v581 = vadd.f32 0.0, %v580
    %v582 = vpop.f32.mrf.mxu0
    %v583 = vadd.f32 0.0, %v582
    %584 = vmatprep.mubr.f32.mxu0 %v332
    %585 = vmatmul.mubr.f32.gmra.mxu0 %v330
    %v586 = vpop.f32.mrf.mxu0
    %v587 = vadd.f32 0.0, %v586
    %v588 = vpop.f32.mrf.mxu0
    %v589 = vadd.f32 0.0, %v588
    %590 = vmatprep.mubr.f32.mxu0 %v338
    %591 = vmatmul.mubr.f32.gmra.mxu0 %v336
    %v592 = vpop.f32.mrf.mxu0
    %v593 = vadd.f32 0.0, %v592
    %v594 = vpop.f32.mrf.mxu0
    %v595 = vadd.f32 0.0, %v594
    %596 = vmatprep.mubr.f32.mxu0 %v344
    %597 = vmatmul.mubr.f32.gmra.mxu0 %v342
    %v598 = vpop.f32.mrf.mxu0
    %v599 = vadd.f32 0.0, %v598
    %v600 = vpop.f32.mrf.mxu0
    %v601 = vadd.f32 0.0, %v600
    %602 = vmatprep.mubr.f32.mxu0 %v350
    %603 = vmatmul.mubr.f32.gmra.mxu0 %v348
    %v604 = vpop.f32.mrf.mxu0
    %v605 = vadd.f32 0.0, %v604
    %v606 = vpop.f32.mrf.mxu0
    %v607 = vadd.f32 0.0, %v606
    %608 = vmatprep.mubr.f32.mxu0 %v356
    %609 = vmatmul.mubr.f32.gmra.mxu0 %v354
    %v610 = vpop.f32.mrf.mxu0
    %v611 = vadd.f32 0.0, %v610
    %v612 = vpop.f32.mrf.mxu0
    %v613 = vadd.f32 0.0, %v612
    %614 = vmatprep.mubr.f32.mxu0 %v362
    %615 = vmatmul.mubr.f32.gmra.mxu0 %v360
    %v616 = vpop.f32.mrf.mxu0
    %v617 = vadd.f32 0.0, %v616
    %v618 = vpop.f32.mrf.mxu0
    %v619 = vadd.f32 0.0, %v618
    %620 = vmatprep.mubr.f32.mxu0 %v368
    %621 = vmatmul.mubr.f32.gmra.mxu0 %v366
    %v622 = vpop.f32.mrf.mxu0
    %v623 = vadd.f32 0.0, %v622
    %v624 = vpop.f32.mrf.mxu0
    %v625 = vadd.f32 0.0, %v624
    %626 = vmatprep.mubr.f32.mxu0 %v374
    %627 = vmatmul.mubr.f32.gmra.mxu0 %v372
    %v628 = vpop.f32.mrf.mxu0
    %v629 = vadd.f32 0.0, %v628
    %v630 = vpop.f32.mrf.mxu0
    %v631 = vadd.f32 0.0, %v630
    %632 = vmatprep.mubr.f32.mxu0 %v380
    %633 = vmatmul.mubr.f32.gmra.mxu0 %v378
    %v634 = vpop.f32.mrf.mxu0
    %v635 = vadd.f32 0.0, %v634
    %v636 = vpop.f32.mrf.mxu0
    %v637 = vadd.f32 0.0, %v636
    %638 = vmatprep.mubr.f32.mxu0 %v386
    %639 = vmatmul.mubr.f32.gmra.mxu0 %v384
    %v640 = vpop.f32.mrf.mxu0
    %v641 = vadd.f32 0.0, %v640
    %v642 = vpop.f32.mrf.mxu0
    %v643 = vadd.f32 0.0, %v642
    %644 = vmatprep.mubr.f32.mxu0 %v392
    %645 = vmatmul.mubr.f32.gmra.mxu0 %v390
    %v646 = vpop.f32.mrf.mxu0
    %v647 = vadd.f32 0.0, %v646
    %v648 = vpop.f32.mrf.mxu0
    %v649 = vadd.f32 0.0, %v648
    %650 = vmatprep.mubr.f32.mxu0 %v398
    %651 = vmatmul.mubr.f32.gmra.mxu0 %v396
    %v652 = vpop.f32.mrf.mxu0
    %v653 = vadd.f32 0.0, %v652
    %v654 = vpop.f32.mrf.mxu0
    %v655 = vadd.f32 0.0, %v654
    %656 = vmatprep.mubr.f32.mxu0 %v404
    %657 = vmatmul.mubr.f32.gmra.mxu0 %v402
    %v658 = vpop.f32.mrf.mxu0
    %v659 = vadd.f32 0.0, %v658
    %v660 = vpop.f32.mrf.mxu0
    %v661 = vadd.f32 0.0, %v660
    %662 = vmatprep.mubr.f32.mxu0 %v410
    %663 = vmatmul.mubr.f32.gmra.mxu0 %v408
    %v664 = vpop.f32.mrf.mxu0
    %v665 = vadd.f32 0.0, %v664
    %v666 = vpop.f32.mrf.mxu0
    %v667 = vadd.f32 0.0, %v666
    %668 = vdwg.mxu0
    %669 = vst [vmem:[#allocation2] sm:$0xff] %v479
    %670 = vst [vmem:[#allocation2 + $0x8] sm:$0xff] %v481
    %671 = vst [vmem:[#allocation2 + $0x10] sm:$0xff] %v485
    %672 = vst [vmem:[#allocation2 + $0x18] sm:$0xff] %v487
    %673 = vst [vmem:[#allocation2 + $0x20] sm:$0xff] %v491
    %674 = vst [vmem:[#allocation2 + $0x28] sm:$0xff] %v493
    %675 = vst [vmem:[#allocation2 + $0x30] sm:$0xff] %v497
    %676 = vst [vmem:[#allocation2 + $0x38] sm:$0xff] %v499
    %677 = vst [vmem:[#allocation2 + $0x40] sm:$0xff] %v503
    %678 = vst [vmem:[#allocation2 + $0x48] sm:$0xff] %v505
    %679 = vst [vmem:[#allocation2 + $0x50] sm:$0xff] %v509
    %680 = vst [vmem:[#allocation2 + $0x58] sm:$0xff] %v511
    %681 = vst [vmem:[#allocation2 + $0x60] sm:$0xff] %v515
    %682 = vst [vmem:[#allocation2 + $0x68] sm:$0xff] %v517
    %683 = vst [vmem:[#allocation2 + $0x70] sm:$0xff] %v521
    %684 = vst [vmem:[#allocation2 + $0x78] sm:$0xff] %v523
    %685 = vst [vmem:[#allocation2 + $0x80] sm:$0xff] %v527
    %686 = vst [vmem:[#allocation2 + $0x88] sm:$0xff] %v529
    %687 = vst [vmem:[#allocation2 + $0x90] sm:$0xff] %v533
    %688 = vst [vmem:[#allocation2 + $0x98] sm:$0xff] %v535
    %689 = vst [vmem:[#allocation2 + $0xa0] sm:$0xff] %v539
    %690 = vst [vmem:[#allocation2 + $0xa8] sm:$0xff] %v541
    %691 = vst [vmem:[#allocation2 + $0xb0] sm:$0xff] %v545
    %692 = vst [vmem:[#allocation2 + $0xb8] sm:$0xff] %v547
    %693 = vst [vmem:[#allocation2 + $0xc0] sm:$0xff] %v551
    %694 = vst [vmem:[#allocation2 + $0xc8] sm:$0xff] %v553
    %695 = vst [vmem:[#allocation2 + $0xd0] sm:$0xff] %v557
    %696 = vst [vmem:[#allocation2 + $0xd8] sm:$0xff] %v559
    %697 = vst [vmem:[#allocation2 + $0xe0] sm:$0xff] %v563
    %698 = vst [vmem:[#allocation2 + $0xe8] sm:$0xff] %v565
    %699 = vst [vmem:[#allocation2 + $0xf0] sm:$0xff] %v569
    %700 = vst [vmem:[#allocation2 + $0xf8] sm:$0xff] %v571
    %701 = vst [vmem:[#allocation2 + $0x100] sm:$0xff] %v575
    %702 = vst [vmem:[#allocation2 + $0x108] sm:$0xff] %v577
    %703 = vst [vmem:[#allocation2 + $0x110] sm:$0xff] %v581
    %704 = vst [vmem:[#allocation2 + $0x118] sm:$0xff] %v583
    %705 = vst [vmem:[#allocation2 + $0x120] sm:$0xff] %v587
    %706 = vst [vmem:[#allocation2 + $0x128] sm:$0xff] %v589
    %707 = vst [vmem:[#allocation2 + $0x130] sm:$0xff] %v593
    %708 = vst [vmem:[#allocation2 + $0x138] sm:$0xff] %v595
    %709 = vst [vmem:[#allocation2 + $0x140] sm:$0xff] %v599
    %710 = vst [vmem:[#allocation2 + $0x148] sm:$0xff] %v601
    %711 = vst [vmem:[#allocation2 + $0x150] sm:$0xff] %v605
    %712 = vst [vmem:[#allocation2 + $0x158] sm:$0xff] %v607
    %713 = vst [vmem:[#allocation2 + $0x160] sm:$0xff] %v611
    %714 = vst [vmem:[#allocation2 + $0x168] sm:$0xff] %v613
    %715 = vst [vmem:[#allocation2 + $0x170] sm:$0xff] %v617
    %716 = vst [vmem:[#allocation2 + $0x178] sm:$0xff] %v619
    %717 = vst [vmem:[#allocation2 + $0x180] sm:$0xff] %v623
    %718 = vst [vmem:[#allocation2 + $0x188] sm:$0xff] %v625
    %719 = vst [vmem:[#allocation2 + $0x190] sm:$0xff] %v629
    %720 = vst [vmem:[#allocation2 + $0x198] sm:$0xff] %v631
    %721 = vst [vmem:[#allocation2 + $0x1a0] sm:$0xff] %v635
    %722 = vst [vmem:[#allocation2 + $0x1a8] sm:$0xff] %v637
    %723 = vst [vmem:[#allocation2 + $0x1b0] sm:$0xff] %v641
    %724 = vst [vmem:[#allocation2 + $0x1b8] sm:$0xff] %v643
    %725 = vst [vmem:[#allocation2 + $0x1c0] sm:$0xff] %v647
    %726 = vst [vmem:[#allocation2 + $0x1c8] sm:$0xff] %v649
    %727 = vst [vmem:[#allocation2 + $0x1d0] sm:$0xff] %v653
    %728 = vst [vmem:[#allocation2 + $0x1d8] sm:$0xff] %v655
    %729 = vst [vmem:[#allocation2 + $0x1e0] sm:$0xff] %v659
    %730 = vst [vmem:[#allocation2 + $0x1e8] sm:$0xff] %v661
    %731 = vst [vmem:[#allocation2 + $0x1f0] sm:$0xff] %v665
    %732 = vst [vmem:[#allocation2 + $0x1f8] sm:$0xff] %v667
    %v733 = vld [vmem:[%s0 + $0x10] sm:$0xff]
    %v734 = vld [vmem:[%s0 + $0x18] sm:$0xff]
    %v735 = vld [vmem:[%s0 + $0x30] sm:$0xff]
    %v736 = vld [vmem:[%s0 + $0x38] sm:$0xff]
    %v737 = vld [vmem:[%s0 + $0x50] sm:$0xff]
    %v738 = vld [vmem:[%s0 + $0x58] sm:$0xff]
    %v739 = vld [vmem:[%s0 + $0x70] sm:$0xff]
    %v740 = vld [vmem:[%s0 + $0x78] sm:$0xff]
    %v741 = vld [vmem:[%s0 + $0x90] sm:$0xff]
    %v742 = vld [vmem:[%s0 + $0x98] sm:$0xff]
    %v743 = vld [vmem:[%s0 + $0xb0] sm:$0xff]
    %v744 = vld [vmem:[%s0 + $0xb8] sm:$0xff]
    %v745 = vld [vmem:[%s0 + $0xd0] sm:$0xff]
    %v746 = vld [vmem:[%s0 + $0xd8] sm:$0xff]
    %v747 = vld [vmem:[%s0 + $0xf0] sm:$0xff]
    %v748 = vld [vmem:[%s0 + $0xf8] sm:$0xff]
    %v749 = vld [vmem:[%s0 + $0x110] sm:$0xff]
    %v750 = vld [vmem:[%s0 + $0x118] sm:$0xff]
    %v751 = vld [vmem:[%s0 + $0x130] sm:$0xff]
    %v752 = vld [vmem:[%s0 + $0x138] sm:$0xff]
    %v753 = vld [vmem:[%s0 + $0x150] sm:$0xff]
    %v754 = vld [vmem:[%s0 + $0x158] sm:$0xff]
    %v755 = vld [vmem:[%s0 + $0x170] sm:$0xff]
    %v756 = vld [vmem:[%s0 + $0x178] sm:$0xff]
    %v757 = vld [vmem:[%s0 + $0x190] sm:$0xff]
    %v758 = vld [vmem:[%s0 + $0x198] sm:$0xff]
    %v759 = vld [vmem:[%s0 + $0x1b0] sm:$0xff]
    %v760 = vld [vmem:[%s0 + $0x1b8] sm:$0xff]
    %v761 = vld [vmem:[%s0 + $0x1d0] sm:$0xff]
    %v762 = vld [vmem:[%s0 + $0x1d8] sm:$0xff]
    %v763 = vld [vmem:[%s0 + $0x1f0] sm:$0xff]
    %v764 = vld [vmem:[%s0 + $0x1f8] sm:$0xff]
    %v765 = vld [vmem:[%s0 + $0x210] sm:$0xff]
    %v766 = vld [vmem:[%s0 + $0x218] sm:$0xff]
    %v767 = vld [vmem:[%s0 + $0x230] sm:$0xff]
    %v768 = vld [vmem:[%s0 + $0x238] sm:$0xff]
    %v769 = vld [vmem:[%s0 + $0x250] sm:$0xff]
    %v770 = vld [vmem:[%s0 + $0x258] sm:$0xff]
    %v771 = vld [vmem:[%s0 + $0x270] sm:$0xff]
    %v772 = vld [vmem:[%s0 + $0x278] sm:$0xff]
    %v773 = vld [vmem:[%s0 + $0x290] sm:$0xff]
    %v774 = vld [vmem:[%s0 + $0x298] sm:$0xff]
    %v775 = vld [vmem:[%s0 + $0x2b0] sm:$0xff]
    %v776 = vld [vmem:[%s0 + $0x2b8] sm:$0xff]
    %v777 = vld [vmem:[%s0 + $0x2d0] sm:$0xff]
    %v778 = vld [vmem:[%s0 + $0x2d8] sm:$0xff]
    %v779 = vld [vmem:[%s0 + $0x2f0] sm:$0xff]
    %v780 = vld [vmem:[%s0 + $0x2f8] sm:$0xff]
    %v781 = vld [vmem:[%s0 + $0x310] sm:$0xff]
    %v782 = vld [vmem:[%s0 + $0x318] sm:$0xff]
    %v783 = vld [vmem:[%s0 + $0x330] sm:$0xff]
    %v784 = vld [vmem:[%s0 + $0x338] sm:$0xff]
    %v785 = vld [vmem:[%s0 + $0x350] sm:$0xff]
    %v786 = vld [vmem:[%s0 + $0x358] sm:$0xff]
    %v787 = vld [vmem:[%s0 + $0x370] sm:$0xff]
    %v788 = vld [vmem:[%s0 + $0x378] sm:$0xff]
    %v789 = vld [vmem:[%s0 + $0x390] sm:$0xff]
    %v790 = vld [vmem:[%s0 + $0x398] sm:$0xff]
    %v791 = vld [vmem:[%s0 + $0x3b0] sm:$0xff]
    %v792 = vld [vmem:[%s0 + $0x3b8] sm:$0xff]
    %v793 = vld [vmem:[%s0 + $0x3d0] sm:$0xff]
    %v794 = vld [vmem:[%s0 + $0x3d8] sm:$0xff]
    %v795 = vld [vmem:[%s0 + $0x3f0] sm:$0xff]
    %v796 = vld [vmem:[%s0 + $0x3f8] sm:$0xff]
    %797 = vmatprep.subr.mxu0 %v46
    %798 = vmatpush1.xpose.msra.mxu0 %v45
    %799 = vmatprep.subr.mxu0 %v44
    %800 = vmatpush1.xpose.msra.mxu0 %v43
    %801 = vmatprep.subr.mxu0 %v42
    %802 = vmatpush1.xpose.msra.mxu0 %v41
    %803 = vmatprep.subr.mxu0 %v40
    %804 = vmatpush1.xpose.msra.mxu0 %v39
    %805 = vmatprep.subr.mxu0 %v38
    %806 = vmatpush1.xpose.msra.mxu0 %v37
    %807 = vmatprep.subr.mxu0 %v36
    %808 = vmatpush1.xpose.msra.mxu0 %v35
    %809 = vmatprep.subr.mxu0 %v34
    %810 = vmatpush1.xpose.msra.mxu0 %v33
    %811 = vmatprep.subr.mxu0 %v32
    %812 = vmatpush1.xpose.msra.mxu0 %v31
    %813 = vmatprep.subr.mxu0 %v30
    %814 = vmatpush1.xpose.msra.mxu0 %v29
    %815 = vmatprep.subr.mxu0 %v28
    %816 = vmatpush1.xpose.msra.mxu0 %v27
    %817 = vmatprep.subr.mxu0 %v26
    %818 = vmatpush1.xpose.msra.mxu0 %v25
    %819 = vmatprep.subr.mxu0 %v24
    %820 = vmatpush1.xpose.msra.mxu0 %v23
    %821 = vmatprep.subr.mxu0 %v22
    %822 = vmatpush1.xpose.msra.mxu0 %v21
    %823 = vmatprep.subr.mxu0 %v20
    %824 = vmatpush1.xpose.msra.mxu0 %v19
    %825 = vmatprep.subr.mxu0 %v18
    %826 = vmatpush1.xpose.msra.mxu0 %v17
    %827 = vmatprep.subr.mxu0 %v16
    %828 = vmatpush1.xpose.msra.mxu0 %v15
    %829 = vmatprep.subr.mxu0 %v78
    %830 = vmatpush2.xpose.msra.mxu0 %v77
    %831 = vmatprep.subr.mxu0 %v76
    %832 = vmatpush2.xpose.msra.mxu0 %v75
    %833 = vmatprep.subr.mxu0 %v74
    %834 = vmatpush2.xpose.msra.mxu0 %v73
    %835 = vmatprep.subr.mxu0 %v72
    %836 = vmatpush2.xpose.msra.mxu0 %v71
    %837 = vmatprep.subr.mxu0 %v70
    %838 = vmatpush2.xpose.msra.mxu0 %v69
    %839 = vmatprep.subr.mxu0 %v68
    %840 = vmatpush2.xpose.msra.mxu0 %v67
    %841 = vmatprep.subr.mxu0 %v66
    %842 = vmatpush2.xpose.msra.mxu0 %v65
    %843 = vmatprep.subr.mxu0 %v64
    %844 = vmatpush2.xpose.msra.mxu0 %v63
    %845 = vmatprep.subr.mxu0 %v62
    %846 = vmatpush2.xpose.msra.mxu0 %v61
    %847 = vmatprep.subr.mxu0 %v60
    %848 = vmatpush2.xpose.msra.mxu0 %v59
    %849 = vmatprep.subr.mxu0 %v58
    %850 = vmatpush2.xpose.msra.mxu0 %v57
    %851 = vmatprep.subr.mxu0 %v56
    %852 = vmatpush2.xpose.msra.mxu0 %v55
    %853 = vmatprep.subr.mxu0 %v54
    %854 = vmatpush2.xpose.msra.mxu0 %v53
    %855 = vmatprep.subr.mxu0 %v52
    %856 = vmatpush2.xpose.msra.mxu0 %v51
    %857 = vmatprep.subr.mxu0 %v50
    %858 = vmatpush2.xpose.msra.mxu0 %v49
    %859 = vmatprep.subr.mxu0 %v48
    %860 = vmatpush2.xpose.msra.mxu0 %v47
    %861 = vmatprep.mubr.f32.mxu0 %v734
    %862 = vmatmul.mubr.f32.gmra.mxu0 %v733
    %v863 = vpop.f32.mrf.mxu0
    %v864 = vadd.f32 %v148, %v863
    %v865 = vpop.f32.mrf.mxu0
    %v866 = vadd.f32 %v152, %v865
    %867 = vmatprep.mubr.f32.mxu0 %v736
    %868 = vmatmul.mubr.f32.gmra.mxu0 %v735
    %v869 = vpop.f32.mrf.mxu0
    %v870 = vadd.f32 %v148, %v869
    %v871 = vpop.f32.mrf.mxu0
    %v872 = vadd.f32 %v152, %v871
    %873 = vmatprep.mubr.f32.mxu0 %v738
    %874 = vmatmul.mubr.f32.gmra.mxu0 %v737
    %v875 = vpop.f32.mrf.mxu0
    %v876 = vadd.f32 %v148, %v875
    %v877 = vpop.f32.mrf.mxu0
    %v878 = vadd.f32 %v152, %v877
    %879 = vmatprep.mubr.f32.mxu0 %v740
    %880 = vmatmul.mubr.f32.gmra.mxu0 %v739
    %v881 = vpop.f32.mrf.mxu0
    %v882 = vadd.f32 %v148, %v881
    %v883 = vpop.f32.mrf.mxu0
    %v884 = vadd.f32 %v152, %v883
    %885 = vmatprep.mubr.f32.mxu0 %v742
    %886 = vmatmul.mubr.f32.gmra.mxu0 %v741
    %v887 = vpop.f32.mrf.mxu0
    %v888 = vadd.f32 %v148, %v887
    %v889 = vpop.f32.mrf.mxu0
    %v890 = vadd.f32 %v152, %v889
    %891 = vmatprep.mubr.f32.mxu0 %v744
    %892 = vmatmul.mubr.f32.gmra.mxu0 %v743
    %v893 = vpop.f32.mrf.mxu0
    %v894 = vadd.f32 %v148, %v893
    %v895 = vpop.f32.mrf.mxu0
    %v896 = vadd.f32 %v152, %v895
    %897 = vmatprep.mubr.f32.mxu0 %v746
    %898 = vmatmul.mubr.f32.gmra.mxu0 %v745
    %v899 = vpop.f32.mrf.mxu0
    %v900 = vadd.f32 %v148, %v899
    %v901 = vpop.f32.mrf.mxu0
    %v902 = vadd.f32 %v152, %v901
    %903 = vmatprep.mubr.f32.mxu0 %v748
    %904 = vmatmul.mubr.f32.gmra.mxu0 %v747
    %v905 = vpop.f32.mrf.mxu0
    %v906 = vadd.f32 %v148, %v905
    %v907 = vpop.f32.mrf.mxu0
    %v908 = vadd.f32 %v152, %v907
    %909 = vmatprep.mubr.f32.mxu0 %v750
    %910 = vmatmul.mubr.f32.gmra.mxu0 %v749
    %v911 = vpop.f32.mrf.mxu0
    %v912 = vadd.f32 %v148, %v911
    %v913 = vpop.f32.mrf.mxu0
    %v914 = vadd.f32 %v152, %v913
    %915 = vmatprep.mubr.f32.mxu0 %v752
    %916 = vmatmul.mubr.f32.gmra.mxu0 %v751
    %v917 = vpop.f32.mrf.mxu0
    %v918 = vadd.f32 %v148, %v917
    %v919 = vpop.f32.mrf.mxu0
    %v920 = vadd.f32 %v152, %v919
    %921 = vmatprep.mubr.f32.mxu0 %v754
    %922 = vmatmul.mubr.f32.gmra.mxu0 %v753
    %v923 = vpop.f32.mrf.mxu0
    %v924 = vadd.f32 %v148, %v923
    %v925 = vpop.f32.mrf.mxu0
    %v926 = vadd.f32 %v152, %v925
    %927 = vmatprep.mubr.f32.mxu0 %v756
    %928 = vmatmul.mubr.f32.gmra.mxu0 %v755
    %v929 = vpop.f32.mrf.mxu0
    %v930 = vadd.f32 %v148, %v929
    %v931 = vpop.f32.mrf.mxu0
    %v932 = vadd.f32 %v152, %v931
    %933 = vmatprep.mubr.f32.mxu0 %v758
    %934 = vmatmul.mubr.f32.gmra.mxu0 %v757
    %v935 = vpop.f32.mrf.mxu0
    %v936 = vadd.f32 %v148, %v935
    %v937 = vpop.f32.mrf.mxu0
    %v938 = vadd.f32 %v152, %v937
    %939 = vmatprep.mubr.f32.mxu0 %v760
    %940 = vmatmul.mubr.f32.gmra.mxu0 %v759
    %v941 = vpop.f32.mrf.mxu0
    %v942 = vadd.f32 %v148, %v941
    %v943 = vpop.f32.mrf.mxu0
    %v944 = vadd.f32 %v152, %v943
    %945 = vmatprep.mubr.f32.mxu0 %v762
    %946 = vmatmul.mubr.f32.gmra.mxu0 %v761
    %v947 = vpop.f32.mrf.mxu0
    %v948 = vadd.f32 %v148, %v947
    %v949 = vpop.f32.mrf.mxu0
    %v950 = vadd.f32 %v152, %v949
    %951 = vmatprep.mubr.f32.mxu0 %v764
    %952 = vmatmul.mubr.f32.gmra.mxu0 %v763
    %v953 = vpop.f32.mrf.mxu0
    %v954 = vadd.f32 %v148, %v953
    %v955 = vpop.f32.mrf.mxu0
    %v956 = vadd.f32 %v152, %v955
    %957 = vmatprep.mubr.f32.mxu0 %v766
    %958 = vmatmul.mubr.f32.gmra.mxu0 %v765
    %v959 = vpop.f32.mrf.mxu0
    %v960 = vadd.f32 %v148, %v959
    %v961 = vpop.f32.mrf.mxu0
    %v962 = vadd.f32 %v152, %v961
    %963 = vmatprep.mubr.f32.mxu0 %v768
    %964 = vmatmul.mubr.f32.gmra.mxu0 %v767
    %v965 = vpop.f32.mrf.mxu0
    %v966 = vadd.f32 %v148, %v965
    %v967 = vpop.f32.mrf.mxu0
    %v968 = vadd.f32 %v152, %v967
    %969 = vmatprep.mubr.f32.mxu0 %v770
    %970 = vmatmul.mubr.f32.gmra.mxu0 %v769
    %v971 = vpop.f32.mrf.mxu0
    %v972 = vadd.f32 %v148, %v971
    %v973 = vpop.f32.mrf.mxu0
    %v974 = vadd.f32 %v152, %v973
    %975 = vmatprep.mubr.f32.mxu0 %v772
    %976 = vmatmul.mubr.f32.gmra.mxu0 %v771
    %v977 = vpop.f32.mrf.mxu0
    %v978 = vadd.f32 %v148, %v977
    %v979 = vpop.f32.mrf.mxu0
    %v980 = vadd.f32 %v152, %v979
    %981 = vmatprep.mubr.f32.mxu0 %v774
    %982 = vmatmul.mubr.f32.gmra.mxu0 %v773
    %v983 = vpop.f32.mrf.mxu0
    %v984 = vadd.f32 %v148, %v983
    %v985 = vpop.f32.mrf.mxu0
    %v986 = vadd.f32 %v152, %v985
    %987 = vmatprep.mubr.f32.mxu0 %v776
    %988 = vmatmul.mubr.f32.gmra.mxu0 %v775
    %v989 = vpop.f32.mrf.mxu0
    %v990 = vadd.f32 %v148, %v989
    %v991 = vpop.f32.mrf.mxu0
    %v992 = vadd.f32 %v152, %v991
    %993 = vmatprep.mubr.f32.mxu0 %v778
    %994 = vmatmul.mubr.f32.gmra.mxu0 %v777
    %v995 = vpop.f32.mrf.mxu0
    %v996 = vadd.f32 %v148, %v995
    %v997 = vpop.f32.mrf.mxu0
    %v998 = vadd.f32 %v152, %v997
    %999 = vmatprep.mubr.f32.mxu0 %v780
    %1000 = vmatmul.mubr.f32.gmra.mxu0 %v779
    %v1001 = vpop.f32.mrf.mxu0
    %v1002 = vadd.f32 %v148, %v1001
    %v1003 = vpop.f32.mrf.mxu0
    %v1004 = vadd.f32 %v152, %v1003
    %1005 = vmatprep.mubr.f32.mxu0 %v782
    %1006 = vmatmul.mubr.f32.gmra.mxu0 %v781
    %v1007 = vpop.f32.mrf.mxu0
    %v1008 = vadd.f32 %v148, %v1007
    %v1009 = vpop.f32.mrf.mxu0
    %v1010 = vadd.f32 %v152, %v1009
    %1011 = vmatprep.mubr.f32.mxu0 %v784
    %1012 = vmatmul.mubr.f32.gmra.mxu0 %v783
    %v1013 = vpop.f32.mrf.mxu0
    %v1014 = vadd.f32 %v148, %v1013
    %v1015 = vpop.f32.mrf.mxu0
    %v1016 = vadd.f32 %v152, %v1015
    %1017 = vmatprep.mubr.f32.mxu0 %v786
    %1018 = vmatmul.mubr.f32.gmra.mxu0 %v785
    %v1019 = vpop.f32.mrf.mxu0
    %v1020 = vadd.f32 %v148, %v1019
    %v1021 = vpop.f32.mrf.mxu0
    %v1022 = vadd.f32 %v152, %v1021
    %1023 = vmatprep.mubr.f32.mxu0 %v788
    %1024 = vmatmul.mubr.f32.gmra.mxu0 %v787
    %v1025 = vpop.f32.mrf.mxu0
    %v1026 = vadd.f32 %v148, %v1025
    %v1027 = vpop.f32.mrf.mxu0
    %v1028 = vadd.f32 %v152, %v1027
    %1029 = vmatprep.mubr.f32.mxu0 %v790
    %1030 = vmatmul.mubr.f32.gmra.mxu0 %v789
    %v1031 = vpop.f32.mrf.mxu0
    %v1032 = vadd.f32 %v148, %v1031
    %v1033 = vpop.f32.mrf.mxu0
    %v1034 = vadd.f32 %v152, %v1033
    %1035 = vmatprep.mubr.f32.mxu0 %v792
    %1036 = vmatmul.mubr.f32.gmra.mxu0 %v791
    %v1037 = vpop.f32.mrf.mxu0
    %v1038 = vadd.f32 %v148, %v1037
    %v1039 = vpop.f32.mrf.mxu0
    %v1040 = vadd.f32 %v152, %v1039
    %1041 = vmatprep.mubr.f32.mxu0 %v794
    %1042 = vmatmul.mubr.f32.gmra.mxu0 %v793
    %v1043 = vpop.f32.mrf.mxu0
    %v1044 = vadd.f32 %v148, %v1043
    %v1045 = vpop.f32.mrf.mxu0
    %v1046 = vadd.f32 %v152, %v1045
    %1047 = vmatprep.mubr.f32.mxu0 %v796
    %1048 = vmatmul.mubr.f32.gmra.mxu0 %v795
    %v1049 = vpop.f32.mrf.mxu0
    %v1050 = vadd.f32 %v148, %v1049
    %v1051 = vpop.f32.mrf.mxu0
    %v1052 = vadd.f32 %v152, %v1051
    %1053 = vdwg.mxu0
    %1054 = vmatprep.subr.mxu0 %v956
    %1055 = vmatpush1.msra.mxu0 %v954
    %1056 = vmatprep.subr.mxu0 %v950
    %1057 = vmatpush1.msra.mxu0 %v948
    %1058 = vmatprep.subr.mxu0 %v944
    %1059 = vmatpush1.msra.mxu0 %v942
    %1060 = vmatprep.subr.mxu0 %v938
    %1061 = vmatpush1.msra.mxu0 %v936
    %1062 = vmatprep.subr.mxu0 %v932
    %1063 = vmatpush1.msra.mxu0 %v930
    %1064 = vmatprep.subr.mxu0 %v926
    %1065 = vmatpush1.msra.mxu0 %v924
    %1066 = vmatprep.subr.mxu0 %v920
    %1067 = vmatpush1.msra.mxu0 %v918
    %1068 = vmatprep.subr.mxu0 %v914
    %1069 = vmatpush1.msra.mxu0 %v912
    %1070 = vmatprep.subr.mxu0 %v908
    %1071 = vmatpush1.msra.mxu0 %v906
    %1072 = vmatprep.subr.mxu0 %v902
    %1073 = vmatpush1.msra.mxu0 %v900
    %1074 = vmatprep.subr.mxu0 %v896
    %1075 = vmatpush1.msra.mxu0 %v894
    %1076 = vmatprep.subr.mxu0 %v890
    %1077 = vmatpush1.msra.mxu0 %v888
    %1078 = vmatprep.subr.mxu0 %v884
    %1079 = vmatpush1.msra.mxu0 %v882
    %1080 = vmatprep.subr.mxu0 %v878
    %1081 = vmatpush1.msra.mxu0 %v876
    %1082 = vmatprep.subr.mxu0 %v872
    %1083 = vmatpush1.msra.mxu0 %v870
    %1084 = vmatprep.subr.mxu0 %v866
    %1085 = vmatpush1.msra.mxu0 %v864
    %1086 = vmatprep.subr.mxu0 %v1052
    %1087 = vmatpush2.msra.mxu0 %v1050
    %1088 = vmatprep.subr.mxu0 %v1046
    %1089 = vmatpush2.msra.mxu0 %v1044
    %1090 = vmatprep.subr.mxu0 %v1040
    %1091 = vmatpush2.msra.mxu0 %v1038
    %1092 = vmatprep.subr.mxu0 %v1034
    %1093 = vmatpush2.msra.mxu0 %v1032
    %1094 = vmatprep.subr.mxu0 %v1028
    %1095 = vmatpush2.msra.mxu0 %v1026
    %1096 = vmatprep.subr.mxu0 %v1022
    %1097 = vmatpush2.msra.mxu0 %v1020
    %1098 = vmatprep.subr.mxu0 %v1016
    %1099 = vmatpush2.msra.mxu0 %v1014
    %1100 = vmatprep.subr.mxu0 %v1010
    %1101 = vmatpush2.msra.mxu0 %v1008
    %1102 = vmatprep.subr.mxu0 %v1004
    %1103 = vmatpush2.msra.mxu0 %v1002
    %1104 = vmatprep.subr.mxu0 %v998
    %1105 = vmatpush2.msra.mxu0 %v996
    %1106 = vmatprep.subr.mxu0 %v992
    %1107 = vmatpush2.msra.mxu0 %v990
    %1108 = vmatprep.subr.mxu0 %v986
    %1109 = vmatpush2.msra.mxu0 %v984
    %1110 = vmatprep.subr.mxu0 %v980
    %1111 = vmatpush2.msra.mxu0 %v978
    %1112 = vmatprep.subr.mxu0 %v974
    %1113 = vmatpush2.msra.mxu0 %v972
    %1114 = vmatprep.subr.mxu0 %v968
    %1115 = vmatpush2.msra.mxu0 %v966
    %1116 = vmatprep.subr.mxu0 %v962
    %1117 = vmatpush2.msra.mxu0 %v960
    %1118 = vmatprep.mubr.f32.mxu0 %v866
    %1119 = vmatmul.mubr.f32.gmra.mxu0 %v864
    %v1120 = vpop.f32.mrf.mxu0
    %v1121 = vadd.f32 0.0, %v1120
    %v1122 = vpop.f32.mrf.mxu0
    %v1123 = vadd.f32 0.0, %v1122
    %1124 = vmatprep.mubr.f32.mxu0 %v872
    %1125 = vmatmul.mubr.f32.gmra.mxu0 %v870
    %v1126 = vpop.f32.mrf.mxu0
    %v1127 = vadd.f32 0.0, %v1126
    %v1128 = vpop.f32.mrf.mxu0
    %v1129 = vadd.f32 0.0, %v1128
    %1130 = vmatprep.mubr.f32.mxu0 %v878
    %1131 = vmatmul.mubr.f32.gmra.mxu0 %v876
    %v1132 = vpop.f32.mrf.mxu0
    %v1133 = vadd.f32 0.0, %v1132
    %v1134 = vpop.f32.mrf.mxu0
    %v1135 = vadd.f32 0.0, %v1134
    %1136 = vmatprep.mubr.f32.mxu0 %v884
    %1137 = vmatmul.mubr.f32.gmra.mxu0 %v882
    %v1138 = vpop.f32.mrf.mxu0
    %v1139 = vadd.f32 0.0, %v1138
    %v1140 = vpop.f32.mrf.mxu0
    %v1141 = vadd.f32 0.0, %v1140
    %1142 = vmatprep.mubr.f32.mxu0 %v890
    %1143 = vmatmul.mubr.f32.gmra.mxu0 %v888
    %v1144 = vpop.f32.mrf.mxu0
    %v1145 = vadd.f32 0.0, %v1144
    %v1146 = vpop.f32.mrf.mxu0
    %v1147 = vadd.f32 0.0, %v1146
    %1148 = vmatprep.mubr.f32.mxu0 %v896
    %1149 = vmatmul.mubr.f32.gmra.mxu0 %v894
    %v1150 = vpop.f32.mrf.mxu0
    %v1151 = vadd.f32 0.0, %v1150
    %v1152 = vpop.f32.mrf.mxu0
    %v1153 = vadd.f32 0.0, %v1152
    %1154 = vmatprep.mubr.f32.mxu0 %v902
    %1155 = vmatmul.mubr.f32.gmra.mxu0 %v900
    %v1156 = vpop.f32.mrf.mxu0
    %v1157 = vadd.f32 0.0, %v1156
    %v1158 = vpop.f32.mrf.mxu0
    %v1159 = vadd.f32 0.0, %v1158
    %1160 = vmatprep.mubr.f32.mxu0 %v908
    %1161 = vmatmul.mubr.f32.gmra.mxu0 %v906
    %v1162 = vpop.f32.mrf.mxu0
    %v1163 = vadd.f32 0.0, %v1162
    %v1164 = vpop.f32.mrf.mxu0
    %v1165 = vadd.f32 0.0, %v1164
    %1166 = vmatprep.mubr.f32.mxu0 %v914
    %1167 = vmatmul.mubr.f32.gmra.mxu0 %v912
    %v1168 = vpop.f32.mrf.mxu0
    %v1169 = vadd.f32 0.0, %v1168
    %v1170 = vpop.f32.mrf.mxu0
    %v1171 = vadd.f32 0.0, %v1170
    %1172 = vmatprep.mubr.f32.mxu0 %v920
    %1173 = vmatmul.mubr.f32.gmra.mxu0 %v918
    %v1174 = vpop.f32.mrf.mxu0
    %v1175 = vadd.f32 0.0, %v1174
    %v1176 = vpop.f32.mrf.mxu0
    %v1177 = vadd.f32 0.0, %v1176
    %1178 = vmatprep.mubr.f32.mxu0 %v926
    %1179 = vmatmul.mubr.f32.gmra.mxu0 %v924
    %v1180 = vpop.f32.mrf.mxu0
    %v1181 = vadd.f32 0.0, %v1180
    %v1182 = vpop.f32.mrf.mxu0
    %v1183 = vadd.f32 0.0, %v1182
    %1184 = vmatprep.mubr.f32.mxu0 %v932
    %1185 = vmatmul.mubr.f32.gmra.mxu0 %v930
    %v1186 = vpop.f32.mrf.mxu0
    %v1187 = vadd.f32 0.0, %v1186
    %v1188 = vpop.f32.mrf.mxu0
    %v1189 = vadd.f32 0.0, %v1188
    %1190 = vmatprep.mubr.f32.mxu0 %v938
    %1191 = vmatmul.mubr.f32.gmra.mxu0 %v936
    %v1192 = vpop.f32.mrf.mxu0
    %v1193 = vadd.f32 0.0, %v1192
    %v1194 = vpop.f32.mrf.mxu0
    %v1195 = vadd.f32 0.0, %v1194
    %1196 = vmatprep.mubr.f32.mxu0 %v944
    %1197 = vmatmul.mubr.f32.gmra.mxu0 %v942
    %v1198 = vpop.f32.mrf.mxu0
    %v1199 = vadd.f32 0.0, %v1198
    %v1200 = vpop.f32.mrf.mxu0
    %v1201 = vadd.f32 0.0, %v1200
    %1202 = vmatprep.mubr.f32.mxu0 %v950
    %1203 = vmatmul.mubr.f32.gmra.mxu0 %v948
    %v1204 = vpop.f32.mrf.mxu0
    %v1205 = vadd.f32 0.0, %v1204
    %v1206 = vpop.f32.mrf.mxu0
    %v1207 = vadd.f32 0.0, %v1206
    %1208 = vmatprep.mubr.f32.mxu0 %v956
    %1209 = vmatmul.mubr.f32.gmra.mxu0 %v954
    %v1210 = vpop.f32.mrf.mxu0
    %v1211 = vadd.f32 0.0, %v1210
    %v1212 = vpop.f32.mrf.mxu0
    %v1213 = vadd.f32 0.0, %v1212
    %1214 = vmatprep.mubr.f32.mxu0 %v962
    %1215 = vmatmul.mubr.f32.gmra.mxu0 %v960
    %v1216 = vpop.f32.mrf.mxu0
    %v1217 = vadd.f32 0.0, %v1216
    %v1218 = vpop.f32.mrf.mxu0
    %v1219 = vadd.f32 0.0, %v1218
    %1220 = vmatprep.mubr.f32.mxu0 %v968
    %1221 = vmatmul.mubr.f32.gmra.mxu0 %v966
    %v1222 = vpop.f32.mrf.mxu0
    %v1223 = vadd.f32 0.0, %v1222
    %v1224 = vpop.f32.mrf.mxu0
    %v1225 = vadd.f32 0.0, %v1224
    %1226 = vmatprep.mubr.f32.mxu0 %v974
    %1227 = vmatmul.mubr.f32.gmra.mxu0 %v972
    %v1228 = vpop.f32.mrf.mxu0
    %v1229 = vadd.f32 0.0, %v1228
    %v1230 = vpop.f32.mrf.mxu0
    %v1231 = vadd.f32 0.0, %v1230
    %1232 = vmatprep.mubr.f32.mxu0 %v980
    %1233 = vmatmul.mubr.f32.gmra.mxu0 %v978
    %v1234 = vpop.f32.mrf.mxu0
    %v1235 = vadd.f32 0.0, %v1234
    %v1236 = vpop.f32.mrf.mxu0
    %v1237 = vadd.f32 0.0, %v1236
    %1238 = vmatprep.mubr.f32.mxu0 %v986
    %1239 = vmatmul.mubr.f32.gmra.mxu0 %v984
    %v1240 = vpop.f32.mrf.mxu0
    %v1241 = vadd.f32 0.0, %v1240
    %v1242 = vpop.f32.mrf.mxu0
    %v1243 = vadd.f32 0.0, %v1242
    %1244 = vmatprep.mubr.f32.mxu0 %v992
    %1245 = vmatmul.mubr.f32.gmra.mxu0 %v990
    %v1246 = vpop.f32.mrf.mxu0
    %v1247 = vadd.f32 0.0, %v1246
    %v1248 = vpop.f32.mrf.mxu0
    %v1249 = vadd.f32 0.0, %v1248
    %1250 = vmatprep.mubr.f32.mxu0 %v998
    %1251 = vmatmul.mubr.f32.gmra.mxu0 %v996
    %v1252 = vpop.f32.mrf.mxu0
    %v1253 = vadd.f32 0.0, %v1252
    %v1254 = vpop.f32.mrf.mxu0
    %v1255 = vadd.f32 0.0, %v1254
    %1256 = vmatprep.mubr.f32.mxu0 %v1004
    %1257 = vmatmul.mubr.f32.gmra.mxu0 %v1002
    %v1258 = vpop.f32.mrf.mxu0
    %v1259 = vadd.f32 0.0, %v1258
    %v1260 = vpop.f32.mrf.mxu0
    %v1261 = vadd.f32 0.0, %v1260
    %1262 = vmatprep.mubr.f32.mxu0 %v1010
    %1263 = vmatmul.mubr.f32.gmra.mxu0 %v1008
    %v1264 = vpop.f32.mrf.mxu0
    %v1265 = vadd.f32 0.0, %v1264
    %v1266 = vpop.f32.mrf.mxu0
    %v1267 = vadd.f32 0.0, %v1266
    %1268 = vmatprep.mubr.f32.mxu0 %v1016
    %1269 = vmatmul.mubr.f32.gmra.mxu0 %v1014
    %v1270 = vpop.f32.mrf.mxu0
    %v1271 = vadd.f32 0.0, %v1270
    %v1272 = vpop.f32.mrf.mxu0
    %v1273 = vadd.f32 0.0, %v1272
    %1274 = vmatprep.mubr.f32.mxu0 %v1022
    %1275 = vmatmul.mubr.f32.gmra.mxu0 %v1020
    %v1276 = vpop.f32.mrf.mxu0
    %v1277 = vadd.f32 0.0, %v1276
    %v1278 = vpop.f32.mrf.mxu0
    %v1279 = vadd.f32 0.0, %v1278
    %1280 = vmatprep.mubr.f32.mxu0 %v1028
    %1281 = vmatmul.mubr.f32.gmra.mxu0 %v1026
    %v1282 = vpop.f32.mrf.mxu0
    %v1283 = vadd.f32 0.0, %v1282
    %v1284 = vpop.f32.mrf.mxu0
    %v1285 = vadd.f32 0.0, %v1284
    %1286 = vmatprep.mubr.f32.mxu0 %v1034
    %1287 = vmatmul.mubr.f32.gmra.mxu0 %v1032
    %v1288 = vpop.f32.mrf.mxu0
    %v1289 = vadd.f32 0.0, %v1288
    %v1290 = vpop.f32.mrf.mxu0
    %v1291 = vadd.f32 0.0, %v1290
    %1292 = vmatprep.mubr.f32.mxu0 %v1040
    %1293 = vmatmul.mubr.f32.gmra.mxu0 %v1038
    %v1294 = vpop.f32.mrf.mxu0
    %v1295 = vadd.f32 0.0, %v1294
    %v1296 = vpop.f32.mrf.mxu0
    %v1297 = vadd.f32 0.0, %v1296
    %1298 = vmatprep.mubr.f32.mxu0 %v1046
    %1299 = vmatmul.mubr.f32.gmra.mxu0 %v1044
    %v1300 = vpop.f32.mrf.mxu0
    %v1301 = vadd.f32 0.0, %v1300
    %v1302 = vpop.f32.mrf.mxu0
    %v1303 = vadd.f32 0.0, %v1302
    %1304 = vmatprep.mubr.f32.mxu0 %v1052
    %1305 = vmatmul.mubr.f32.gmra.mxu0 %v1050
    %v1306 = vpop.f32.mrf.mxu0
    %v1307 = vadd.f32 0.0, %v1306
    %v1308 = vpop.f32.mrf.mxu0
    %v1309 = vadd.f32 0.0, %v1308
    %1310 = vdwg.mxu0
    %s1311 = scalar_lea.vmem [#allocation2], 512
    %1312 = vst [vmem:[%s1311] sm:$0xff] %v1121
    %1313 = vst [vmem:[%s1311 + $0x8] sm:$0xff] %v1123
    %1314 = vst [vmem:[%s1311 + $0x10] sm:$0xff] %v1127
    %1315 = vst [vmem:[%s1311 + $0x18] sm:$0xff] %v1129
    %1316 = vst [vmem:[%s1311 + $0x20] sm:$0xff] %v1133
    %1317 = vst [vmem:[%s1311 + $0x28] sm:$0xff] %v1135
    %1318 = vst [vmem:[%s1311 + $0x30] sm:$0xff] %v1139
    %1319 = vst [vmem:[%s1311 + $0x38] sm:$0xff] %v1141
    %1320 = vst [vmem:[%s1311 + $0x40] sm:$0xff] %v1145
    %1321 = vst [vmem:[%s1311 + $0x48] sm:$0xff] %v1147
    %1322 = vst [vmem:[%s1311 + $0x50] sm:$0xff] %v1151
    %1323 = vst [vmem:[%s1311 + $0x58] sm:$0xff] %v1153
    %1324 = vst [vmem:[%s1311 + $0x60] sm:$0xff] %v1157
    %1325 = vst [vmem:[%s1311 + $0x68] sm:$0xff] %v1159
    %1326 = vst [vmem:[%s1311 + $0x70] sm:$0xff] %v1163
    %1327 = vst [vmem:[%s1311 + $0x78] sm:$0xff] %v1165
    %1328 = vst [vmem:[%s1311 + $0x80] sm:$0xff] %v1169
    %1329 = vst [vmem:[%s1311 + $0x88] sm:$0xff] %v1171
    %1330 = vst [vmem:[%s1311 + $0x90] sm:$0xff] %v1175
    %1331 = vst [vmem:[%s1311 + $0x98] sm:$0xff] %v1177
    %1332 = vst [vmem:[%s1311 + $0xa0] sm:$0xff] %v1181
    %1333 = vst [vmem:[%s1311 + $0xa8] sm:$0xff] %v1183
    %1334 = vst [vmem:[%s1311 + $0xb0] sm:$0xff] %v1187
    %1335 = vst [vmem:[%s1311 + $0xb8] sm:$0xff] %v1189
    %1336 = vst [vmem:[%s1311 + $0xc0] sm:$0xff] %v1193
    %1337 = vst [vmem:[%s1311 + $0xc8] sm:$0xff] %v1195
    %1338 = vst [vmem:[%s1311 + $0xd0] sm:$0xff] %v1199
    %1339 = vst [vmem:[%s1311 + $0xd8] sm:$0xff] %v1201
    %1340 = vst [vmem:[%s1311 + $0xe0] sm:$0xff] %v1205
    %1341 = vst [vmem:[%s1311 + $0xe8] sm:$0xff] %v1207
    %1342 = vst [vmem:[%s1311 + $0xf0] sm:$0xff] %v1211
    %1343 = vst [vmem:[%s1311 + $0xf8] sm:$0xff] %v1213
    %1344 = vst [vmem:[%s1311 + $0x100] sm:$0xff] %v1217
    %1345 = vst [vmem:[%s1311 + $0x108] sm:$0xff] %v1219
    %1346 = vst [vmem:[%s1311 + $0x110] sm:$0xff] %v1223
    %1347 = vst [vmem:[%s1311 + $0x118] sm:$0xff] %v1225
    %1348 = vst [vmem:[%s1311 + $0x120] sm:$0xff] %v1229
    %1349 = vst [vmem:[%s1311 + $0x128] sm:$0xff] %v1231
    %1350 = vst [vmem:[%s1311 + $0x130] sm:$0xff] %v1235
    %1351 = vst [vmem:[%s1311 + $0x138] sm:$0xff] %v1237
    %1352 = vst [vmem:[%s1311 + $0x140] sm:$0xff] %v1241
    %1353 = vst [vmem:[%s1311 + $0x148] sm:$0xff] %v1243
    %1354 = vst [vmem:[%s1311 + $0x150] sm:$0xff] %v1247
    %1355 = vst [vmem:[%s1311 + $0x158] sm:$0xff] %v1249
    %1356 = vst [vmem:[%s1311 + $0x160] sm:$0xff] %v1253
    %1357 = vst [vmem:[%s1311 + $0x168] sm:$0xff] %v1255
    %1358 = vst [vmem:[%s1311 + $0x170] sm:$0xff] %v1259
    %1359 = vst [vmem:[%s1311 + $0x178] sm:$0xff] %v1261
    %1360 = vst [vmem:[%s1311 + $0x180] sm:$0xff] %v1265
    %1361 = vst [vmem:[%s1311 + $0x188] sm:$0xff] %v1267
    %1362 = vst [vmem:[%s1311 + $0x190] sm:$0xff] %v1271
    %1363 = vst [vmem:[%s1311 + $0x198] sm:$0xff] %v1273
    %1364 = vst [vmem:[%s1311 + $0x1a0] sm:$0xff] %v1277
    %1365 = vst [vmem:[%s1311 + $0x1a8] sm:$0xff] %v1279
    %1366 = vst [vmem:[%s1311 + $0x1b0] sm:$0xff] %v1283
    %1367 = vst [vmem:[%s1311 + $0x1b8] sm:$0xff] %v1285
    %1368 = vst [vmem:[%s1311 + $0x1c0] sm:$0xff] %v1289
    %1369 = vst [vmem:[%s1311 + $0x1c8] sm:$0xff] %v1291
    %1370 = vst [vmem:[%s1311 + $0x1d0] sm:$0xff] %v1295
    %1371 = vst [vmem:[%s1311 + $0x1d8] sm:$0xff] %v1297
    %1372 = vst [vmem:[%s1311 + $0x1e0] sm:$0xff] %v1301
    %1373 = vst [vmem:[%s1311 + $0x1e8] sm:$0xff] %v1303
    %1374 = vst [vmem:[%s1311 + $0x1f0] sm:$0xff] %v1307
    %1375 = vst [vmem:[%s1311 + $0x1f8] sm:$0xff] %v1309
    // Predicated region
    $region14: #{model_forward.1} parent=1 // pred_check
      _
    $region15: #{model_forward.1} parent=1 // pred_check_branch
      %1377 = sbr.rel (0) target = $region17
    $region16: #{model_forward.1} parent=1 // pred_region
      %s1379 = ssub.s32 16384, 16384
      %1380 = vsyncadd [#allocation3], %s1379
      %s1381 = sshll.u32 [#allocation2], 4
      %s1382 = int_to_ptr.vmem [resolvable:$true] %s1381
      %1387 = dma.vmem_to_hbm [thread:$0]  %s1382, 16384, %s3, [#allocation3], 256, 256, 16
    $region17: #{model_forward.1} parent=1 // pred_fallthru
      _
    // Predicated region
    $region18: #{model_forward.1} parent=1 // pred_check
      _
    $region19: #{model_forward.1} parent=1 // pred_check_branch
      %1389 = sbr.rel (0) target = $region21
    $region20: #{model_forward.1} parent=1 // pred_region
      %1390 = dma.done [#allocation3], 16384
    $region21: #{model_forward.1} parent=1 // pred_fallthru
      _
    %1391 = vsyncpa [#allocation3], 1

</llo_original>
